<compile_context>
chip_gen: v7x
topology: tpu7x:2x2x1
jax: 0.10.0
libtpu: 0.0.40
codegen_flags: <defaults>
</compile_context>

<pallas_src>
import functools

import jax
import jax.numpy as jnp
from jax.experimental import pallas as pl
from jax.experimental.pallas import tpu as pltpu

THRESHOLD = 1.0 - 0.1  # matches self.threshold in the PyTorch module


def _act_fused_kernel(
    # inputs (VMEM)
    state_ref,    # (TR, H)       f32   initial state rows for this tile
    time_ref,     # (Lt, H)       f32   time encoding rows (Lt == TR // time_reps)
    w_ref,        # (H, H)        bf16/f32  transition weight (fn = ReLU(Linear))
    bias_f_ref,   # (max_hop, H)  f32   per-step transition bias: pos@wf + bf
    wp_ref,       # (1, H)        f32   halting projection row
    bias_p_ref,   # (max_hop, 1)  f32   per-step halting bias: pos@wp + bp
    # outputs
    prev_ref,     # (TR, H)       f32   previous_state rows
    stats_ref,    # (TR, 2)       f32   [remainders, n_updates]
    *, max_hop, time_reps,
):
    f32 = jnp.float32
    TR, H = state_ref.shape

    # Grid-constant operands: loaded once, reused by every ACT step.
    time_tile = time_ref[...]
    if time_reps > 1:
        time_tile = jnp.tile(time_tile, (time_reps, 1))     # (TR, H)
    w_mm = w_ref[...]                                        # bf16 (or f32)
    wp_row = wp_ref[...]                                     # (1, H) f32

    state = state_ref[...]
    halt = jnp.zeros((TR, 1), f32)
    rem = jnp.zeros((TR, 1), f32)
    nupd = jnp.zeros((TR, 1), f32)
    prev = jnp.zeros((TR, H), f32)

    def step_body(step, carry):
        state, halt, rem, nupd, prev = carry
        st = state + time_tile                               # (TR, H) f32

        # Transition fn on the MXU: ReLU((state+time+pos) @ wf + bf); the pos/bf
        # contribution is pre-folded into bias_f[step] host-side. f32 accumulation.
        out = jnp.dot(st.astype(w_mm.dtype), w_mm, preferred_element_type=f32)
        s_fn = jnp.maximum(out + bias_f_ref[pl.ds(step, 1), :], 0.0)

        # Halting logit in f32 on VPU/XLU (no extra MXU columns, decisions bit-stable).
        p_logit = (jnp.sum(st * wp_row, axis=-1, keepdims=True)
                   + bias_p_ref[pl.ds(step, 1), :])
        p = jax.nn.sigmoid(p_logit)                          # (TR, 1) f32

        # ACT bookkeeping — exact 0/1 masks, same ordering as the PyTorch reference.
        still_old = (halt < 1.0).astype(f32)
        add = halt + p * still_old
        new_halted = (add > THRESHOLD).astype(f32) * still_old
        still = (add <= THRESHOLD).astype(f32) * still_old
        halt = halt + p * still
        rem = rem + new_halted * (1.0 - halt)
        halt = halt + new_halted * rem
        nupd = nupd + still + new_halted
        uw = p * still + new_halted * rem                    # update weights, (TR, 1)
        prev = prev + uw * (s_fn - prev)                     # lerp: one fewer VPU op
        return s_fn, halt, rem, nupd, prev

    # TODO(synk): the PyTorch while-loop early-exits once every position halts; here all
    # max_hop steps run (halted rows are exact no-ops, uw == 0, so results are identical).
    state, halt, rem, nupd, prev = jax.lax.fori_loop(
        0, max_hop, step_body, (state, halt, rem, nupd, prev),
        unroll=(max_hop <= 8))

    # Single write-back at the end; remainders / n_updates packed into one store.
    prev_ref[...] = prev
    stats_ref[...] = jnp.concatenate([rem, nupd], axis=1)


def _vmem_limit_bytes():
    cap = 64 * 1024 * 1024
    try:
        info = pltpu.get_tpu_info()
        cap = int(getattr(info, "vmem_capacity_bytes", cap)) or cap
    except Exception:  # pragma: no cover - conservative fallback
        pass
    return int(min(0.75 * cap, 96 * 1024 * 1024))


def _choose_row_tile(BL, L, cap_rows):
    """Pick a row tile TR: multiple of 8, within the VMEM budget, >= 2 grid tiles when
    possible (v7x megacore), and sequence-aligned so time_enc never needs a per-row
    HBM broadcast. Returns (TR, aligned)."""
    cap = max(8, min(cap_rows, 2048))
    if BL // 2 >= 8:
        cap = min(cap, BL // 2)                 # keep >= 2 tiles for megacore sharding
    for tr in range(min(cap, BL), 7, -1):
        if BL % tr == 0 and tr % 8 == 0 and (tr % L == 0 or L % tr == 0):
            return tr, True
    if BL <= cap:                               # tiny problem: one full tile
        return BL, True
    # Unaligned shapes: pad the row count and materialize the time broadcast.
    return max((cap // 8) * 8, 8), False


@functools.partial(jax.jit, static_argnames=("max_hop", "use_bf16"))
def act_forward(state, inputs, time_enc, pos_enc, wp, bp, wf, bf, *,
                max_hop, use_bf16=True):
    """Non-decoding ACT forward. Returns (previous_state, (remainders, n_updates))."""
    B, L, H = inputs.shape
    BL = B * L
    f32 = jnp.float32

    # Host-side prep (tiny): fold pos_enc + biases into per-step tables; cast the
    # transition weight to bf16 exactly once; halting projection stays an f32 row.
    wf32 = wf.astype(f32)
    wp32 = wp.astype(f32).reshape(H, 1)
    pos = pos_enc[0, :max_hop, :].astype(f32)                  # (max_hop, H)
    bias_f = pos @ wf32 + bf.astype(f32).reshape(1, H)         # (max_hop, H)
    bias_p = pos @ wp32 + bp.astype(f32).reshape(1, 1)         # (max_hop, 1)
    wp_row = wp32.reshape(1, H)                                # (1, H)
    w_mm = wf32.astype(jnp.bfloat16) if use_bf16 else wf32

    state0 = state.astype(f32).reshape(BL, H)
    time2d = time_enc[0, :L, :].astype(f32)                    # (L, H)

    # Row tiling from an explicit VMEM budget.
    vmem_limit = _vmem_limit_bytes()
    const_bytes = (H * H * (2 if use_bf16 else 4)              # weight (single buffer)
                   + (max_hop + 1 + L) * H * 4 + max_hop * 4)  # bias tables, wp, time
    budget = max(vmem_limit - 2 * const_bytes, vmem_limit // 4)
    cap_rows = max(8, budget // (48 * H + 128))                # ~bytes/row of live state
    TR, aligned = _choose_row_tile(BL, L, cap_rows)
    BLp = -(-BL // TR) * TR                                    # padded row count
    grid = (BLp // TR,)

    if BLp != BL:
        state0 = jnp.pad(state0, ((0, BLp - BL), (0, 0)))

    # Grid-constant operands: constant index map + single buffering (Buffered(1)).
    const = functools.partial(pl.BlockSpec, index_map=lambda i: (0, 0),
                              pipeline_mode=pl.Buffered(buffer_count=1))

    if aligned and TR % L == 0:
        # Tile covers whole sequences: replicate the (L, H) encoding inside the kernel.
        time_arr = time2d
        time_spec = const((L, H))
        time_reps = TR // L
    elif aligned:
        # Tile is a sub-sequence (TR divides L): index-map into the (L, H) encoding.
        nblk = L // TR
        time_arr = time2d
        time_spec = pl.BlockSpec((TR, H), lambda i: (i % nblk, 0))
        time_reps = 1
    else:
        # TODO(synk): rare unaligned shapes — fall back to a materialized row broadcast.
        time_arr = jnp.broadcast_to(time2d[None], (B, L, H)).reshape(BL, H)
        time_arr = jnp.pad(time_arr, ((0, BLp - BL), (0, 0)))
        time_spec = pl.BlockSpec((TR, H), lambda i: (i, 0))
        time_reps = 1

    kernel = functools.partial(_act_fused_kernel, max_hop=max_hop, time_reps=time_reps)

    prev2d, stats2d = pl.pallas_call(
        kernel,
        grid=grid,
        in_specs=[
            pl.BlockSpec((TR, H), lambda i: (i, 0)),   # state rows (pipelined)
            time_spec,                                 # time encoding
            const((H, H)),                             # transition weight (once)
            const((max_hop, H)),                       # per-step transition bias (once)
            const((1, H)),                             # halting projection row (once)
            const((max_hop, 1)),                       # per-step halting bias (once)
        ],
        out_specs=(
            pl.BlockSpec((TR, H), lambda i: (i, 0)),   # previous_state rows
            pl.BlockSpec((TR, 2), lambda i: (i, 0)),   # packed [remainders, n_updates]
        ),
        out_shape=(
            jax.ShapeDtypeStruct((BLp, H), f32),
            jax.ShapeDtypeStruct((BLp, 2), f32),
        ),
        compiler_params=pltpu.CompilerParams(
            dimension_semantics=("parallel",),
            vmem_limit_bytes=vmem_limit,
        ),
    )(state0, time_arr, w_mm, bias_f, wp_row, bias_p)

    previous_state = prev2d[:BL].reshape(B, L, H)
    remainders = stats2d[:BL, 0].reshape(B, L)
    n_updates = stats2d[:BL, 1].reshape(B, L)
    return previous_state, (remainders, n_updates)


if __name__ == "__main__":
    B, L, H = 2, 8, 32
    max_hop = 6

    key = jax.random.PRNGKey(0)
    k1, k2, k3, k4, k5, k6 = jax.random.split(key, 6)

    inputs = jax.random.normal(k1, (B, L, H), jnp.float32)
    state = inputs                                             # initial state
    time_enc = 0.1 * jax.random.normal(k2, (1, L, H), jnp.float32)
    pos_enc = 0.1 * jax.random.normal(k3, (1, max_hop, H), jnp.float32)

    # self.p = nn.Linear(hidden_size, 1); self.p.bias.data.fill_(1)
    wp = jax.random.normal(k4, (H, 1), jnp.float32) / jnp.sqrt(jnp.float32(H))
    bp = jnp.ones((1, 1), jnp.float32)
    # TODO(synk): fn is caller-provided in PyTorch; a ReLU(Linear) transition is used here.
    wf = jax.random.normal(k5, (H, H), jnp.float32) / jnp.sqrt(jnp.float32(H))
    bf = 0.1 * jax.random.normal(k6, (1, H), jnp.float32)

    prev_state, (remainders, n_updates) = act_forward(
        state, inputs, time_enc, pos_enc, wp, bp, wf, bf, max_hop=max_hop
    )
    jax.block_until_ready(prev_state)
    jax.block_until_ready(remainders)
    jax.block_until_ready(n_updates)

    assert prev_state.shape == (B, L, H)
    assert remainders.shape == (B, L)
    assert n_updates.shape == (B, L)
    print("KERNEL_OK")
</pallas_src>

<mosaic_0001>
module attributes {stable_mosaic.version = 11 : i64} {
  func.func @_act_fused_kernel(%arg0: i32, %arg1: memref<8x32xf32, #tpu.memory_space<vmem>>, %arg2: memref<8x32xf32, #tpu.memory_space<vmem>>, %arg3: memref<32x32xbf16, #tpu.memory_space<vmem>>, %arg4: memref<6x32xf32, #tpu.memory_space<vmem>>, %arg5: memref<1x32xf32, #tpu.memory_space<vmem>>, %arg6: memref<6x1xf32, #tpu.memory_space<vmem>>, %arg7: memref<8x32xf32, #tpu.memory_space<vmem>>, %arg8: memref<8x2xf32, #tpu.memory_space<vmem>>) attributes {dimension_semantics = [#tpu.dimension_semantics<parallel>], iteration_bounds = array<i64: 2>, scalar_prefetch = 0 : i64, scratch_operands = 0 : i64, tpu.core_type = #tpu.core_type<tc>, window_params = [{transform_indices = @transform_0, window_bounds = array<i64: 8, 32>}, {pipeline_mode = #tpu.pipeline_mode<synchronous>, transform_indices = @transform_1, window_bounds = array<i64: 8, 32>}, {pipeline_mode = #tpu.pipeline_mode<synchronous>, transform_indices = @transform_2, window_bounds = array<i64: 32, 32>}, {pipeline_mode = #tpu.pipeline_mode<synchronous>, transform_indices = @transform_3, window_bounds = array<i64: 6, 32>}, {pipeline_mode = #tpu.pipeline_mode<synchronous>, transform_indices = @transform_4, window_bounds = array<i64: 1, 32>}, {pipeline_mode = #tpu.pipeline_mode<synchronous>, transform_indices = @transform_5, window_bounds = array<i64: 6, 1>}, {transform_indices = @transform_6, window_bounds = array<i64: 8, 32>}, {transform_indices = @transform_7, window_bounds = array<i64: 8, 2>}]} {
    %c0 = arith.constant 0 : index
    %c0_0 = arith.constant 0 : index
    %0 = vector.load %arg2[%c0, %c0_0] : memref<8x32xf32, #tpu.memory_space<vmem>>, vector<8x32xf32>
    %c0_1 = arith.constant 0 : index
    %c0_2 = arith.constant 0 : index
    %1 = vector.load %arg3[%c0_1, %c0_2] : memref<32x32xbf16, #tpu.memory_space<vmem>>, vector<32x32xbf16>
    %c0_3 = arith.constant 0 : index
    %c0_4 = arith.constant 0 : index
    %2 = vector.load %arg5[%c0_3, %c0_4] : memref<1x32xf32, #tpu.memory_space<vmem>>, vector<1x32xf32>
    %c0_5 = arith.constant 0 : index
    %c0_6 = arith.constant 0 : index
    %3 = vector.load %arg1[%c0_5, %c0_6] : memref<8x32xf32, #tpu.memory_space<vmem>>, vector<8x32xf32>
    %cst = arith.constant 0.000000e+00 : f32
    %4 = vector.broadcast %cst : f32 to vector<8x1xf32>
    %cst_7 = arith.constant 0.000000e+00 : f32
    %5 = vector.broadcast %cst_7 : f32 to vector<8x1xf32>
    %cst_8 = arith.constant 0.000000e+00 : f32
    %6 = vector.broadcast %cst_8 : f32 to vector<8x1xf32>
    %cst_9 = arith.constant 0.000000e+00 : f32
    %7 = vector.broadcast %cst_9 : f32 to vector<8x32xf32>
    %c0_i32 = arith.constant 0 : i32
    %8 = arith.addf %3, %0 : vector<8x32xf32>
    %9 = arith.truncf %8 : vector<8x32xf32> to vector<8x32xbf16>
    %cst_10 = arith.constant dense<0.000000e+00> : vector<8x32xf32>
    %10 = tpu.matmul %9, %1, %cst_10 {dimension_numbers = #tpu.dot_dimension_numbers<[1], [0], [0], [1], [0, 0, 1, 1], [], []>} : vector<8x32xbf16>, vector<32x32xbf16>, vector<8x32xf32> -> vector<8x32xf32>
    %11 = arith.index_cast %c0_i32 : i32 to index
    %c0_11 = arith.constant 0 : index
    %12 = vector.load %arg4[%11, %c0_11] : memref<6x32xf32, #tpu.memory_space<vmem>>, vector<1x32xf32>
    %13 = vector.broadcast %12 : vector<1x32xf32> to vector<8x32xf32>
    %14 = arith.addf %10, %13 : vector<8x32xf32>
    %cst_12 = arith.constant 0.000000e+00 : f32
    %15 = vector.broadcast %cst_12 : f32 to vector<8x32xf32>
    %16 = arith.maximumf %14, %15 : vector<8x32xf32>
    %17 = vector.broadcast %2 : vector<1x32xf32> to vector<8x32xf32>
    %18 = arith.mulf %8, %17 : vector<8x32xf32>
    %cst_13 = arith.constant dense<0.000000e+00> : vector<8xf32>
    %19 = vector.multi_reduction <add>, %18, %cst_13 [1] : vector<8x32xf32> to vector<8xf32>
    %20 = vector.shape_cast %19 : vector<8xf32> to vector<8x1xf32>
    %21 = arith.index_cast %c0_i32 : i32 to index
    %c0_14 = arith.constant 0 : index
    %22 = vector.load %arg6[%21, %c0_14] : memref<6x1xf32, #tpu.memory_space<vmem>>, vector<1x1xf32>
    %23 = vector.broadcast %22 : vector<1x1xf32> to vector<8x1xf32>
    %24 = arith.addf %20, %23 : vector<8x1xf32>
    %25 = arith.negf %24 : vector<8x1xf32>
    %26 = math.exp %25 : vector<8x1xf32>
    %cst_15 = arith.constant 1.000000e+00 : f32
    %27 = vector.broadcast %cst_15 : f32 to vector<8x1xf32>
    %28 = arith.addf %27, %26 : vector<8x1xf32>
    %29 = arith.divf %27, %28 : vector<8x1xf32>
    %cst_16 = arith.constant 1.000000e+00 : f32
    %30 = vector.broadcast %cst_16 : f32 to vector<8x1xf32>
    %31 = arith.cmpf olt, %4, %30 : vector<8x1xf32>
    %32 = arith.extui %31 : vector<8x1xi1> to vector<8x1xi32>
    %33 = arith.sitofp %32 : vector<8x1xi32> to vector<8x1xf32>
    %34 = arith.mulf %29, %33 : vector<8x1xf32>
    %35 = arith.addf %4, %34 : vector<8x1xf32>
    %cst_17 = arith.constant 0.899999976 : f32
    %36 = vector.broadcast %cst_17 : f32 to vector<8x1xf32>
    %37 = arith.cmpf ogt, %35, %36 : vector<8x1xf32>
    %38 = arith.extui %37 : vector<8x1xi1> to vector<8x1xi32>
    %39 = arith.sitofp %38 : vector<8x1xi32> to vector<8x1xf32>
    %40 = arith.mulf %39, %33 : vector<8x1xf32>
    %cst_18 = arith.constant 0.899999976 : f32
    %41 = vector.broadcast %cst_18 : f32 to vector<8x1xf32>
    %42 = arith.cmpf ole, %35, %41 : vector<8x1xf32>
    %43 = arith.extui %42 : vector<8x1xi1> to vector<8x1xi32>
    %44 = arith.sitofp %43 : vector<8x1xi32> to vector<8x1xf32>
    %45 = arith.mulf %44, %33 : vector<8x1xf32>
    %46 = arith.mulf %29, %45 : vector<8x1xf32>
    %47 = arith.addf %4, %46 : vector<8x1xf32>
    %cst_19 = arith.constant 1.000000e+00 : f32
    %48 = vector.broadcast %cst_19 : f32 to vector<8x1xf32>
    %49 = arith.subf %48, %47 : vector<8x1xf32>
    %50 = arith.mulf %40, %49 : vector<8x1xf32>
    %51 = arith.addf %5, %50 : vector<8x1xf32>
    %52 = arith.mulf %40, %51 : vector<8x1xf32>
    %53 = arith.addf %47, %52 : vector<8x1xf32>
    %54 = arith.addf %6, %45 : vector<8x1xf32>
    %55 = arith.addf %54, %40 : vector<8x1xf32>
    %56 = arith.mulf %29, %45 : vector<8x1xf32>
    %57 = arith.mulf %40, %51 : vector<8x1xf32>
    %58 = arith.addf %56, %57 : vector<8x1xf32>
    %59 = arith.subf %16, %7 : vector<8x32xf32>
    %60 = vector.broadcast %58 : vector<8x1xf32> to vector<8x32xf32>
    %61 = arith.mulf %60, %59 : vector<8x32xf32>
    %62 = arith.addf %7, %61 : vector<8x32xf32>
    %c1_i32 = arith.constant 1 : i32
    %63 = arith.addf %16, %0 : vector<8x32xf32>
    %64 = arith.truncf %63 : vector<8x32xf32> to vector<8x32xbf16>
    %cst_20 = arith.constant dense<0.000000e+00> : vector<8x32xf32>
    %65 = tpu.matmul %64, %1, %cst_20 {dimension_numbers = #tpu.dot_dimension_numbers<[1], [0], [0], [1], [0, 0, 1, 1], [], []>} : vector<8x32xbf16>, vector<32x32xbf16>, vector<8x32xf32> -> vector<8x32xf32>
    %66 = arith.index_cast %c1_i32 : i32 to index
    %c0_21 = arith.constant 0 : index
    %67 = vector.load %arg4[%66, %c0_21] : memref<6x32xf32, #tpu.memory_space<vmem>>, vector<1x32xf32>
    %68 = vector.broadcast %67 : vector<1x32xf32> to vector<8x32xf32>
    %69 = arith.addf %65, %68 : vector<8x32xf32>
    %cst_22 = arith.constant 0.000000e+00 : f32
    %70 = vector.broadcast %cst_22 : f32 to vector<8x32xf32>
    %71 = arith.maximumf %69, %70 : vector<8x32xf32>
    %72 = vector.broadcast %2 : vector<1x32xf32> to vector<8x32xf32>
    %73 = arith.mulf %63, %72 : vector<8x32xf32>
    %cst_23 = arith.constant dense<0.000000e+00> : vector<8xf32>
    %74 = vector.multi_reduction <add>, %73, %cst_23 [1] : vector<8x32xf32> to vector<8xf32>
    %75 = vector.shape_cast %74 : vector<8xf32> to vector<8x1xf32>
    %76 = arith.index_cast %c1_i32 : i32 to index
    %c0_24 = arith.constant 0 : index
    %77 = vector.load %arg6[%76, %c0_24] : memref<6x1xf32, #tpu.memory_space<vmem>>, vector<1x1xf32>
    %78 = vector.broadcast %77 : vector<1x1xf32> to vector<8x1xf32>
    %79 = arith.addf %75, %78 : vector<8x1xf32>
    %80 = arith.negf %79 : vector<8x1xf32>
    %81 = math.exp %80 : vector<8x1xf32>
    %cst_25 = arith.constant 1.000000e+00 : f32
    %82 = vector.broadcast %cst_25 : f32 to vector<8x1xf32>
    %83 = arith.addf %82, %81 : vector<8x1xf32>
    %84 = arith.divf %82, %83 : vector<8x1xf32>
    %cst_26 = arith.constant 1.000000e+00 : f32
    %85 = vector.broadcast %cst_26 : f32 to vector<8x1xf32>
    %86 = arith.cmpf olt, %53, %85 : vector<8x1xf32>
    %87 = arith.extui %86 : vector<8x1xi1> to vector<8x1xi32>
    %88 = arith.sitofp %87 : vector<8x1xi32> to vector<8x1xf32>
    %89 = arith.mulf %84, %88 : vector<8x1xf32>
    %90 = arith.addf %53, %89 : vector<8x1xf32>
    %cst_27 = arith.constant 0.899999976 : f32
    %91 = vector.broadcast %cst_27 : f32 to vector<8x1xf32>
    %92 = arith.cmpf ogt, %90, %91 : vector<8x1xf32>
    %93 = arith.extui %92 : vector<8x1xi1> to vector<8x1xi32>
    %94 = arith.sitofp %93 : vector<8x1xi32> to vector<8x1xf32>
    %95 = arith.mulf %94, %88 : vector<8x1xf32>
    %cst_28 = arith.constant 0.899999976 : f32
    %96 = vector.broadcast %cst_28 : f32 to vector<8x1xf32>
    %97 = arith.cmpf ole, %90, %96 : vector<8x1xf32>
    %98 = arith.extui %97 : vector<8x1xi1> to vector<8x1xi32>
    %99 = arith.sitofp %98 : vector<8x1xi32> to vector<8x1xf32>
    %100 = arith.mulf %99, %88 : vector<8x1xf32>
    %101 = arith.mulf %84, %100 : vector<8x1xf32>
    %102 = arith.addf %53, %101 : vector<8x1xf32>
    %cst_29 = arith.constant 1.000000e+00 : f32
    %103 = vector.broadcast %cst_29 : f32 to vector<8x1xf32>
    %104 = arith.subf %103, %102 : vector<8x1xf32>
    %105 = arith.mulf %95, %104 : vector<8x1xf32>
    %106 = arith.addf %51, %105 : vector<8x1xf32>
    %107 = arith.mulf %95, %106 : vector<8x1xf32>
    %108 = arith.addf %102, %107 : vector<8x1xf32>
    %109 = arith.addf %55, %100 : vector<8x1xf32>
    %110 = arith.addf %109, %95 : vector<8x1xf32>
    %111 = arith.mulf %84, %100 : vector<8x1xf32>
    %112 = arith.mulf %95, %106 : vector<8x1xf32>
    %113 = arith.addf %111, %112 : vector<8x1xf32>
    %114 = arith.subf %71, %62 : vector<8x32xf32>
    %115 = vector.broadcast %113 : vector<8x1xf32> to vector<8x32xf32>
    %116 = arith.mulf %115, %114 : vector<8x32xf32>
    %117 = arith.addf %62, %116 : vector<8x32xf32>
    %c2_i32 = arith.constant 2 : i32
    %118 = arith.addf %71, %0 : vector<8x32xf32>
    %119 = arith.truncf %118 : vector<8x32xf32> to vector<8x32xbf16>
    %cst_30 = arith.constant dense<0.000000e+00> : vector<8x32xf32>
    %120 = tpu.matmul %119, %1, %cst_30 {dimension_numbers = #tpu.dot_dimension_numbers<[1], [0], [0], [1], [0, 0, 1, 1], [], []>} : vector<8x32xbf16>, vector<32x32xbf16>, vector<8x32xf32> -> vector<8x32xf32>
    %121 = arith.index_cast %c2_i32 : i32 to index
    %c0_31 = arith.constant 0 : index
    %122 = vector.load %arg4[%121, %c0_31] : memref<6x32xf32, #tpu.memory_space<vmem>>, vector<1x32xf32>
    %123 = vector.broadcast %122 : vector<1x32xf32> to vector<8x32xf32>
    %124 = arith.addf %120, %123 : vector<8x32xf32>
    %cst_32 = arith.constant 0.000000e+00 : f32
    %125 = vector.broadcast %cst_32 : f32 to vector<8x32xf32>
    %126 = arith.maximumf %124, %125 : vector<8x32xf32>
    %127 = vector.broadcast %2 : vector<1x32xf32> to vector<8x32xf32>
    %128 = arith.mulf %118, %127 : vector<8x32xf32>
    %cst_33 = arith.constant dense<0.000000e+00> : vector<8xf32>
    %129 = vector.multi_reduction <add>, %128, %cst_33 [1] : vector<8x32xf32> to vector<8xf32>
    %130 = vector.shape_cast %129 : vector<8xf32> to vector<8x1xf32>
    %131 = arith.index_cast %c2_i32 : i32 to index
    %c0_34 = arith.constant 0 : index
    %132 = vector.load %arg6[%131, %c0_34] : memref<6x1xf32, #tpu.memory_space<vmem>>, vector<1x1xf32>
    %133 = vector.broadcast %132 : vector<1x1xf32> to vector<8x1xf32>
    %134 = arith.addf %130, %133 : vector<8x1xf32>
    %135 = arith.negf %134 : vector<8x1xf32>
    %136 = math.exp %135 : vector<8x1xf32>
    %cst_35 = arith.constant 1.000000e+00 : f32
    %137 = vector.broadcast %cst_35 : f32 to vector<8x1xf32>
    %138 = arith.addf %137, %136 : vector<8x1xf32>
    %139 = arith.divf %137, %138 : vector<8x1xf32>
    %cst_36 = arith.constant 1.000000e+00 : f32
    %140 = vector.broadcast %cst_36 : f32 to vector<8x1xf32>
    %141 = arith.cmpf olt, %108, %140 : vector<8x1xf32>
    %142 = arith.extui %141 : vector<8x1xi1> to vector<8x1xi32>
    %143 = arith.sitofp %142 : vector<8x1xi32> to vector<8x1xf32>
    %144 = arith.mulf %139, %143 : vector<8x1xf32>
    %145 = arith.addf %108, %144 : vector<8x1xf32>
    %cst_37 = arith.constant 0.899999976 : f32
    %146 = vector.broadcast %cst_37 : f32 to vector<8x1xf32>
    %147 = arith.cmpf ogt, %145, %146 : vector<8x1xf32>
    %148 = arith.extui %147 : vector<8x1xi1> to vector<8x1xi32>
    %149 = arith.sitofp %148 : vector<8x1xi32> to vector<8x1xf32>
    %150 = arith.mulf %149, %143 : vector<8x1xf32>
    %cst_38 = arith.constant 0.899999976 : f32
    %151 = vector.broadcast %cst_38 : f32 to vector<8x1xf32>
    %152 = arith.cmpf ole, %145, %151 : vector<8x1xf32>
    %153 = arith.extui %152 : vector<8x1xi1> to vector<8x1xi32>
    %154 = arith.sitofp %153 : vector<8x1xi32> to vector<8x1xf32>
    %155 = arith.mulf %154, %143 : vector<8x1xf32>
    %156 = arith.mulf %139, %155 : vector<8x1xf32>
    %157 = arith.addf %108, %156 : vector<8x1xf32>
    %cst_39 = arith.constant 1.000000e+00 : f32
    %158 = vector.broadcast %cst_39 : f32 to vector<8x1xf32>
    %159 = arith.subf %158, %157 : vector<8x1xf32>
    %160 = arith.mulf %150, %159 : vector<8x1xf32>
    %161 = arith.addf %106, %160 : vector<8x1xf32>
    %162 = arith.mulf %150, %161 : vector<8x1xf32>
    %163 = arith.addf %157, %162 : vector<8x1xf32>
    %164 = arith.addf %110, %155 : vector<8x1xf32>
    %165 = arith.addf %164, %150 : vector<8x1xf32>
    %166 = arith.mulf %139, %155 : vector<8x1xf32>
    %167 = arith.mulf %150, %161 : vector<8x1xf32>
    %168 = arith.addf %166, %167 : vector<8x1xf32>
    %169 = arith.subf %126, %117 : vector<8x32xf32>
    %170 = vector.broadcast %168 : vector<8x1xf32> to vector<8x32xf32>
    %171 = arith.mulf %170, %169 : vector<8x32xf32>
    %172 = arith.addf %117, %171 : vector<8x32xf32>
    %c3_i32 = arith.constant 3 : i32
    %173 = arith.addf %126, %0 : vector<8x32xf32>
    %174 = arith.truncf %173 : vector<8x32xf32> to vector<8x32xbf16>
    %cst_40 = arith.constant dense<0.000000e+00> : vector<8x32xf32>
    %175 = tpu.matmul %174, %1, %cst_40 {dimension_numbers = #tpu.dot_dimension_numbers<[1], [0], [0], [1], [0, 0, 1, 1], [], []>} : vector<8x32xbf16>, vector<32x32xbf16>, vector<8x32xf32> -> vector<8x32xf32>
    %176 = arith.index_cast %c3_i32 : i32 to index
    %c0_41 = arith.constant 0 : index
    %177 = vector.load %arg4[%176, %c0_41] : memref<6x32xf32, #tpu.memory_space<vmem>>, vector<1x32xf32>
    %178 = vector.broadcast %177 : vector<1x32xf32> to vector<8x32xf32>
    %179 = arith.addf %175, %178 : vector<8x32xf32>
    %cst_42 = arith.constant 0.000000e+00 : f32
    %180 = vector.broadcast %cst_42 : f32 to vector<8x32xf32>
    %181 = arith.maximumf %179, %180 : vector<8x32xf32>
    %182 = vector.broadcast %2 : vector<1x32xf32> to vector<8x32xf32>
    %183 = arith.mulf %173, %182 : vector<8x32xf32>
    %cst_43 = arith.constant dense<0.000000e+00> : vector<8xf32>
    %184 = vector.multi_reduction <add>, %183, %cst_43 [1] : vector<8x32xf32> to vector<8xf32>
    %185 = vector.shape_cast %184 : vector<8xf32> to vector<8x1xf32>
    %186 = arith.index_cast %c3_i32 : i32 to index
    %c0_44 = arith.constant 0 : index
    %187 = vector.load %arg6[%186, %c0_44] : memref<6x1xf32, #tpu.memory_space<vmem>>, vector<1x1xf32>
    %188 = vector.broadcast %187 : vector<1x1xf32> to vector<8x1xf32>
    %189 = arith.addf %185, %188 : vector<8x1xf32>
    %190 = arith.negf %189 : vector<8x1xf32>
    %191 = math.exp %190 : vector<8x1xf32>
    %cst_45 = arith.constant 1.000000e+00 : f32
    %192 = vector.broadcast %cst_45 : f32 to vector<8x1xf32>
    %193 = arith.addf %192, %191 : vector<8x1xf32>
    %194 = arith.divf %192, %193 : vector<8x1xf32>
    %cst_46 = arith.constant 1.000000e+00 : f32
    %195 = vector.broadcast %cst_46 : f32 to vector<8x1xf32>
    %196 = arith.cmpf olt, %163, %195 : vector<8x1xf32>
    %197 = arith.extui %196 : vector<8x1xi1> to vector<8x1xi32>
    %198 = arith.sitofp %197 : vector<8x1xi32> to vector<8x1xf32>
    %199 = arith.mulf %194, %198 : vector<8x1xf32>
    %200 = arith.addf %163, %199 : vector<8x1xf32>
    %cst_47 = arith.constant 0.899999976 : f32
    %201 = vector.broadcast %cst_47 : f32 to vector<8x1xf32>
    %202 = arith.cmpf ogt, %200, %201 : vector<8x1xf32>
    %203 = arith.extui %202 : vector<8x1xi1> to vector<8x1xi32>
    %204 = arith.sitofp %203 : vector<8x1xi32> to vector<8x1xf32>
    %205 = arith.mulf %204, %198 : vector<8x1xf32>
    %cst_48 = arith.constant 0.899999976 : f32
    %206 = vector.broadcast %cst_48 : f32 to vector<8x1xf32>
    %207 = arith.cmpf ole, %200, %206 : vector<8x1xf32>
    %208 = arith.extui %207 : vector<8x1xi1> to vector<8x1xi32>
    %209 = arith.sitofp %208 : vector<8x1xi32> to vector<8x1xf32>
    %210 = arith.mulf %209, %198 : vector<8x1xf32>
    %211 = arith.mulf %194, %210 : vector<8x1xf32>
    %212 = arith.addf %163, %211 : vector<8x1xf32>
    %cst_49 = arith.constant 1.000000e+00 : f32
    %213 = vector.broadcast %cst_49 : f32 to vector<8x1xf32>
    %214 = arith.subf %213, %212 : vector<8x1xf32>
    %215 = arith.mulf %205, %214 : vector<8x1xf32>
    %216 = arith.addf %161, %215 : vector<8x1xf32>
    %217 = arith.mulf %205, %216 : vector<8x1xf32>
    %218 = arith.addf %212, %217 : vector<8x1xf32>
    %219 = arith.addf %165, %210 : vector<8x1xf32>
    %220 = arith.addf %219, %205 : vector<8x1xf32>
    %221 = arith.mulf %194, %210 : vector<8x1xf32>
    %222 = arith.mulf %205, %216 : vector<8x1xf32>
    %223 = arith.addf %221, %222 : vector<8x1xf32>
    %224 = arith.subf %181, %172 : vector<8x32xf32>
    %225 = vector.broadcast %223 : vector<8x1xf32> to vector<8x32xf32>
    %226 = arith.mulf %225, %224 : vector<8x32xf32>
    %227 = arith.addf %172, %226 : vector<8x32xf32>
    %c4_i32 = arith.constant 4 : i32
    %228 = arith.addf %181, %0 : vector<8x32xf32>
    %229 = arith.truncf %228 : vector<8x32xf32> to vector<8x32xbf16>
    %cst_50 = arith.constant dense<0.000000e+00> : vector<8x32xf32>
    %230 = tpu.matmul %229, %1, %cst_50 {dimension_numbers = #tpu.dot_dimension_numbers<[1], [0], [0], [1], [0, 0, 1, 1], [], []>} : vector<8x32xbf16>, vector<32x32xbf16>, vector<8x32xf32> -> vector<8x32xf32>
    %231 = arith.index_cast %c4_i32 : i32 to index
    %c0_51 = arith.constant 0 : index
    %232 = vector.load %arg4[%231, %c0_51] : memref<6x32xf32, #tpu.memory_space<vmem>>, vector<1x32xf32>
    %233 = vector.broadcast %232 : vector<1x32xf32> to vector<8x32xf32>
    %234 = arith.addf %230, %233 : vector<8x32xf32>
    %cst_52 = arith.constant 0.000000e+00 : f32
    %235 = vector.broadcast %cst_52 : f32 to vector<8x32xf32>
    %236 = arith.maximumf %234, %235 : vector<8x32xf32>
    %237 = vector.broadcast %2 : vector<1x32xf32> to vector<8x32xf32>
    %238 = arith.mulf %228, %237 : vector<8x32xf32>
    %cst_53 = arith.constant dense<0.000000e+00> : vector<8xf32>
    %239 = vector.multi_reduction <add>, %238, %cst_53 [1] : vector<8x32xf32> to vector<8xf32>
    %240 = vector.shape_cast %239 : vector<8xf32> to vector<8x1xf32>
    %241 = arith.index_cast %c4_i32 : i32 to index
    %c0_54 = arith.constant 0 : index
    %242 = vector.load %arg6[%241, %c0_54] : memref<6x1xf32, #tpu.memory_space<vmem>>, vector<1x1xf32>
    %243 = vector.broadcast %242 : vector<1x1xf32> to vector<8x1xf32>
    %244 = arith.addf %240, %243 : vector<8x1xf32>
    %245 = arith.negf %244 : vector<8x1xf32>
    %246 = math.exp %245 : vector<8x1xf32>
    %cst_55 = arith.constant 1.000000e+00 : f32
    %247 = vector.broadcast %cst_55 : f32 to vector<8x1xf32>
    %248 = arith.addf %247, %246 : vector<8x1xf32>
    %249 = arith.divf %247, %248 : vector<8x1xf32>
    %cst_56 = arith.constant 1.000000e+00 : f32
    %250 = vector.broadcast %cst_56 : f32 to vector<8x1xf32>
    %251 = arith.cmpf olt, %218, %250 : vector<8x1xf32>
    %252 = arith.extui %251 : vector<8x1xi1> to vector<8x1xi32>
    %253 = arith.sitofp %252 : vector<8x1xi32> to vector<8x1xf32>
    %254 = arith.mulf %249, %253 : vector<8x1xf32>
    %255 = arith.addf %218, %254 : vector<8x1xf32>
    %cst_57 = arith.constant 0.899999976 : f32
    %256 = vector.broadcast %cst_57 : f32 to vector<8x1xf32>
    %257 = arith.cmpf ogt, %255, %256 : vector<8x1xf32>
    %258 = arith.extui %257 : vector<8x1xi1> to vector<8x1xi32>
    %259 = arith.sitofp %258 : vector<8x1xi32> to vector<8x1xf32>
    %260 = arith.mulf %259, %253 : vector<8x1xf32>
    %cst_58 = arith.constant 0.899999976 : f32
    %261 = vector.broadcast %cst_58 : f32 to vector<8x1xf32>
    %262 = arith.cmpf ole, %255, %261 : vector<8x1xf32>
    %263 = arith.extui %262 : vector<8x1xi1> to vector<8x1xi32>
    %264 = arith.sitofp %263 : vector<8x1xi32> to vector<8x1xf32>
    %265 = arith.mulf %264, %253 : vector<8x1xf32>
    %266 = arith.mulf %249, %265 : vector<8x1xf32>
    %267 = arith.addf %218, %266 : vector<8x1xf32>
    %cst_59 = arith.constant 1.000000e+00 : f32
    %268 = vector.broadcast %cst_59 : f32 to vector<8x1xf32>
    %269 = arith.subf %268, %267 : vector<8x1xf32>
    %270 = arith.mulf %260, %269 : vector<8x1xf32>
    %271 = arith.addf %216, %270 : vector<8x1xf32>
    %272 = arith.mulf %260, %271 : vector<8x1xf32>
    %273 = arith.addf %267, %272 : vector<8x1xf32>
    %274 = arith.addf %220, %265 : vector<8x1xf32>
    %275 = arith.addf %274, %260 : vector<8x1xf32>
    %276 = arith.mulf %249, %265 : vector<8x1xf32>
    %277 = arith.mulf %260, %271 : vector<8x1xf32>
    %278 = arith.addf %276, %277 : vector<8x1xf32>
    %279 = arith.subf %236, %227 : vector<8x32xf32>
    %280 = vector.broadcast %278 : vector<8x1xf32> to vector<8x32xf32>
    %281 = arith.mulf %280, %279 : vector<8x32xf32>
    %282 = arith.addf %227, %281 : vector<8x32xf32>
    %c5_i32 = arith.constant 5 : i32
    %283 = arith.addf %236, %0 : vector<8x32xf32>
    %284 = arith.truncf %283 : vector<8x32xf32> to vector<8x32xbf16>
    %cst_60 = arith.constant dense<0.000000e+00> : vector<8x32xf32>
    %285 = tpu.matmul %284, %1, %cst_60 {dimension_numbers = #tpu.dot_dimension_numbers<[1], [0], [0], [1], [0, 0, 1, 1], [], []>} : vector<8x32xbf16>, vector<32x32xbf16>, vector<8x32xf32> -> vector<8x32xf32>
    %286 = arith.index_cast %c5_i32 : i32 to index
    %c0_61 = arith.constant 0 : index
    %287 = vector.load %arg4[%286, %c0_61] : memref<6x32xf32, #tpu.memory_space<vmem>>, vector<1x32xf32>
    %288 = vector.broadcast %287 : vector<1x32xf32> to vector<8x32xf32>
    %289 = arith.addf %285, %288 : vector<8x32xf32>
    %cst_62 = arith.constant 0.000000e+00 : f32
    %290 = vector.broadcast %cst_62 : f32 to vector<8x32xf32>
    %291 = arith.maximumf %289, %290 : vector<8x32xf32>
    %292 = vector.broadcast %2 : vector<1x32xf32> to vector<8x32xf32>
    %293 = arith.mulf %283, %292 : vector<8x32xf32>
    %cst_63 = arith.constant dense<0.000000e+00> : vector<8xf32>
    %294 = vector.multi_reduction <add>, %293, %cst_63 [1] : vector<8x32xf32> to vector<8xf32>
    %295 = vector.shape_cast %294 : vector<8xf32> to vector<8x1xf32>
    %296 = arith.index_cast %c5_i32 : i32 to index
    %c0_64 = arith.constant 0 : index
    %297 = vector.load %arg6[%296, %c0_64] : memref<6x1xf32, #tpu.memory_space<vmem>>, vector<1x1xf32>
    %298 = vector.broadcast %297 : vector<1x1xf32> to vector<8x1xf32>
    %299 = arith.addf %295, %298 : vector<8x1xf32>
    %300 = arith.negf %299 : vector<8x1xf32>
    %301 = math.exp %300 : vector<8x1xf32>
    %cst_65 = arith.constant 1.000000e+00 : f32
    %302 = vector.broadcast %cst_65 : f32 to vector<8x1xf32>
    %303 = arith.addf %302, %301 : vector<8x1xf32>
    %304 = arith.divf %302, %303 : vector<8x1xf32>
    %cst_66 = arith.constant 1.000000e+00 : f32
    %305 = vector.broadcast %cst_66 : f32 to vector<8x1xf32>
    %306 = arith.cmpf olt, %273, %305 : vector<8x1xf32>
    %307 = arith.extui %306 : vector<8x1xi1> to vector<8x1xi32>
    %308 = arith.sitofp %307 : vector<8x1xi32> to vector<8x1xf32>
    %309 = arith.mulf %304, %308 : vector<8x1xf32>
    %310 = arith.addf %273, %309 : vector<8x1xf32>
    %cst_67 = arith.constant 0.899999976 : f32
    %311 = vector.broadcast %cst_67 : f32 to vector<8x1xf32>
    %312 = arith.cmpf ogt, %310, %311 : vector<8x1xf32>
    %313 = arith.extui %312 : vector<8x1xi1> to vector<8x1xi32>
    %314 = arith.sitofp %313 : vector<8x1xi32> to vector<8x1xf32>
    %315 = arith.mulf %314, %308 : vector<8x1xf32>
    %cst_68 = arith.constant 0.899999976 : f32
    %316 = vector.broadcast %cst_68 : f32 to vector<8x1xf32>
    %317 = arith.cmpf ole, %310, %316 : vector<8x1xf32>
    %318 = arith.extui %317 : vector<8x1xi1> to vector<8x1xi32>
    %319 = arith.sitofp %318 : vector<8x1xi32> to vector<8x1xf32>
    %320 = arith.mulf %319, %308 : vector<8x1xf32>
    %321 = arith.mulf %304, %320 : vector<8x1xf32>
    %322 = arith.addf %273, %321 : vector<8x1xf32>
    %cst_69 = arith.constant 1.000000e+00 : f32
    %323 = vector.broadcast %cst_69 : f32 to vector<8x1xf32>
    %324 = arith.subf %323, %322 : vector<8x1xf32>
    %325 = arith.mulf %315, %324 : vector<8x1xf32>
    %326 = arith.addf %271, %325 : vector<8x1xf32>
    %327 = arith.mulf %315, %326 : vector<8x1xf32>
    %328 = arith.addf %322, %327 : vector<8x1xf32>
    %329 = arith.addf %275, %320 : vector<8x1xf32>
    %330 = arith.addf %329, %315 : vector<8x1xf32>
    %331 = arith.mulf %304, %320 : vector<8x1xf32>
    %332 = arith.mulf %315, %326 : vector<8x1xf32>
    %333 = arith.addf %331, %332 : vector<8x1xf32>
    %334 = arith.subf %291, %282 : vector<8x32xf32>
    %335 = vector.broadcast %333 : vector<8x1xf32> to vector<8x32xf32>
    %336 = arith.mulf %335, %334 : vector<8x32xf32>
    %337 = arith.addf %282, %336 : vector<8x32xf32>
    %c6_i32 = arith.constant 6 : i32
    %c0_70 = arith.constant 0 : index
    %c0_71 = arith.constant 0 : index
    %338 = vector.load %arg7[%c0_70, %c0_71] : memref<8x32xf32, #tpu.memory_space<vmem>>, vector<8x32xf32>
    tpu.vector_store %arg7[%c0_70, %c0_71], %337 {strides = array<i32>} : memref<8x32xf32, #tpu.memory_space<vmem>>, vector<8x32xf32>,
    %339 = tpu.concatenate %326, %330 in 1 : vector<8x1xf32>, vector<8x1xf32> -> vector<8x2xf32>
    %c0_72 = arith.constant 0 : index
    %c0_73 = arith.constant 0 : index
    %340 = vector.load %arg8[%c0_72, %c0_73] : memref<8x2xf32, #tpu.memory_space<vmem>>, vector<8x2xf32>
    tpu.vector_store %arg8[%c0_72, %c0_73], %339 {strides = array<i32>} : memref<8x2xf32, #tpu.memory_space<vmem>>, vector<8x2xf32>,
    return
  }
  func.func @transform_0(%arg0: i32) -> (i32, i32) {
    %c0_i32 = arith.constant 0 : i32
    %c0_i32_0 = arith.constant 0 : i32
    return %arg0, %c0_i32 : i32, i32
  }
  func.func @transform_1(%arg0: i32) -> (i32, i32) {
    %c0_i32 = arith.constant 0 : i32
    %c0_i32_0 = arith.constant 0 : i32
    %c0_i32_1 = arith.constant 0 : i32
    return %c0_i32, %c0_i32_0 : i32, i32
  }
  func.func @transform_2(%arg0: i32) -> (i32, i32) {
    %c0_i32 = arith.constant 0 : i32
    %c0_i32_0 = arith.constant 0 : i32
    %c0_i32_1 = arith.constant 0 : i32
    return %c0_i32, %c0_i32_0 : i32, i32
  }
  func.func @transform_3(%arg0: i32) -> (i32, i32) {
    %c0_i32 = arith.constant 0 : i32
    %c0_i32_0 = arith.constant 0 : i32
    %c0_i32_1 = arith.constant 0 : i32
    return %c0_i32, %c0_i32_0 : i32, i32
  }
  func.func @transform_4(%arg0: i32) -> (i32, i32) {
    %c0_i32 = arith.constant 0 : i32
    %c0_i32_0 = arith.constant 0 : i32
    %c0_i32_1 = arith.constant 0 : i32
    return %c0_i32, %c0_i32_0 : i32, i32
  }
  func.func @transform_5(%arg0: i32) -> (i32, i32) {
    %c0_i32 = arith.constant 0 : i32
    %c0_i32_0 = arith.constant 0 : i32
    %c0_i32_1 = arith.constant 0 : i32
    return %c0_i32, %c0_i32_0 : i32, i32
  }
  func.func @transform_6(%arg0: i32) -> (i32, i32) {
    %c0_i32 = arith.constant 0 : i32
    %c0_i32_0 = arith.constant 0 : i32
    return %arg0, %c0_i32 : i32, i32
  }
  func.func @transform_7(%arg0: i32) -> (i32, i32) {
    %c0_i32 = arith.constant 0 : i32
    %c0_i32_0 = arith.constant 0 : i32
    return %arg0, %c0_i32 : i32, i32
  }
}

</mosaic_0001>

<llo_original>
// kernel: squeeze.7
$region0: #{squeeze.7}
  %s0 = inlined_call_operand.vmem [shape: f32[16], index: 0, kind: input, shape index: {}]
  %s1 = inlined_call_operand.hbm [shape: f32[2,8], index: 1, kind: output, shape index: {}]
  $region1: #{squeeze.7} parent=0
    #allocation0 [shape = 'u8[1024]{0}', space=vmem, size = 0x400, scoped, tag = 'operand span for operand 1']
    #allocation1 [shape = 's32[1]{0}', space=sflag, size = 0x4, scoped, tag = 'scoped memory for squeeze.7']
    #allocation2 [shape = 'u8[4096]{0}', space=vmem, size = 0x1000, scoped, tag = 'scoped mem for output reshape']
    #allocation3 [shape = 'u8[4096]{0}', space=vmem, size = 0x1000, scoped, tag = 'scoped mem for input reshape']
    %2 = vsyncpa [#allocation1], 0
    %s4 = sshllo.u32 0, 1
    %v5 = vld [vmem:[%s0] sm:%s4]
    %6 = vst [vmem:[#allocation3] sm:%s4] %v5
    %v7 = vld [vmem:[#allocation3] sm:$0x1]
    %vm8 = vcmask 64512
    %9 = vst.msk [vmem:[#allocation2] sm:$0x1] %vm8, %v7
    %v10 = vld [vmem:[#allocation3] sm:$0x1]
    %11 = vrot.lane.b32.xlu0 %v10, 120
    %v12 = vpop.permute.xlu0 %11
    %vm13 = vcmask 64512
    %s14 = scalar_lea.vmem [#allocation2], 1
    %15 = vst.msk [vmem:[%s14] sm:$0x1] %vm13, %v12
    %s17 = sshllo.u32 0, 2
    %v19 = vld [vmem:[#allocation2] sm:%s17]
    %s20 = sshllo.u32 0, 2
    %21 = vst [vmem:[#allocation0] sm:%s20] %v19
    %s23 = ssub.s32 32, 32
    %24 = vsyncadd [#allocation1], %s23
    %s26 = sshll.u32 [#allocation0], 4
    %s27 = int_to_ptr.vmem [resolvable:$true] %s26
    %29 = dma.vmem_to_hbm [thread:$0]  %s27, 32, %s1, [#allocation1]
    %30 = dma.done [#allocation1], 32
    %31 = vsyncpa [#allocation1], 1

// kernel: act_forward.1
$region0: #{act_forward.1}
  #allocation0 [shape = 'u32[]', space=smem, size = 0x4, offset = 0x4, fixed_abs, tag = 'smem constant byte address 0x4 - core index']
  #allocation1 [shape = 'u32[144,128]{1,0:T(1,128)}', space=vmem, size = 0x12000, scoped, tag = 'internal scratch']
  %s0 = inlined_call_operand.vmem [shape: f32[16,32], index: 0, kind: input, shape index: {}]
  %s1 = inlined_call_operand.vmem [shape: f32[8,32], index: 1, kind: input, shape index: {}]
  %s2 = inlined_call_operand.vmem [shape: bf16[32,32], index: 2, kind: input, shape index: {}]
  %s3 = inlined_call_operand.vmem [shape: f32[6,32], index: 3, kind: input, shape index: {}]
  %s4 = inlined_call_operand.vmem [shape: f32[1,32], index: 4, kind: input, shape index: {}]
  %s5 = inlined_call_operand.vmem [shape: f32[6,1], index: 5, kind: input, shape index: {}]
  %s6 = inlined_call_operand.hbm [shape: f32[16,32], index: 6, kind: output, shape index: {0}]
  %s7 = inlined_call_operand.vmem [shape: f32[16,2], index: 7, kind: output, shape index: {1}]
  %8 = xla_tuple %s6, %s7
  %s9 = sld [smem:[#allocation0]]
  $region65: #{act_forward.1} parent=0
    _
  %s11 = ssub.s32 1, %s9
  %s12 = scalar_select 0, %s11, %s9
  $region1: #{act_forward.1} parent=0
    #allocation2 [shape = 'u8[8192]{0}', space=vmem, size = 0x2000, scoped, tag = 'output window, operand 0']
    #allocation3 [shape = 's32[2]{0}', space=sflag, size = 0x8, scoped, tag = 'scoped memory for act_forward.1']
    %13 = vsyncpa [#allocation3], 0
    %s14 = scalar_lea.sflag [#allocation3], 1
    %15 = vsyncpa %s14, 0
    loop: start=0, step=1, limit=4
    $region2: #{act_forward.1} parent=1 // loop_pre_header
      _
    $region3: #{act_forward.1} parent=1 // loop_header
      %s17 = sphi 0, %s21
      %p18 = scmp.ge.s32.totalorder %s17, 4
      %s27 = sphi 0, %s29
      %s30 = sphi 0, %s27
      %s31 = sphi 0, %s30
      %s47 = sphi 0, %s31
      %s51 = sphi 0, %s51
      %s53 = sphi 0, %s51
      %s54 = sphi 0, %s53
      %s68 = sphi 0, %s54
      %s72 = sphi 0, %s72
      %s74 = sphi 0, %s72
      %s75 = sphi 0, %s74
      %s89 = sphi 0, %s75
      %s93 = sphi 0, %s93
      %s95 = sphi 0, %s93
      %s96 = sphi 0, %s95
      %s110 = sphi 0, %s96
      %s114 = sphi 0, %s114
      %s116 = sphi 0, %s114
      %s117 = sphi 0, %s116
      %s131 = sphi 0, %s117
      %s135 = sphi 0, %s135
      %s137 = sphi 0, %s135
      %s138 = sphi 0, %s137
      %s152 = sphi 0, %s138
      %s158 = sphi 0, %s160
      %s161 = sphi 0, %s158
      %s162 = sphi 0, %s161
      %s178 = sphi 0, %s162
      %s184 = sphi 0, %s186
      %s187 = sphi 0, %s184
      %s188 = sphi 0, %s187
      %s204 = sphi 0, %s188
    $region4: #{act_forward.1} parent=1 // loop_header_branch
      %20 = sbr.rel (%p18) target = $region8
    $region5: #{act_forward.1} parent=1 // loop_body
      %s22 = ssub.s32 %s17, 1
      %s23 = ssub.s32 %s17, 2
      %s24 = sadd.s32 %s17, 1
      %s25 = ssub.s32 %s17, %s24
      %p26 = scmp.eq.s32.totalorder %s25, 0
      %s28 = sadd.s32 %s27, 1
      %s29 = scalar_select %p26, %s27, %s28
      %p32 = pneg %p26
      %p33 = scmp.eq.s32.totalorder %s17, 1
      %p34 = por %p32, %p33
      %p35 = scmp.ne.s32.totalorder %s27, %s30
      %p36 = scmp.eq.s32.totalorder %s17, 0
      %p37 = por %p35, %p36
      %p38 = scmp.ne.s32.totalorder %s27, %s30
      %p39 = scmp.eq.s32.totalorder %s22, 1
      %p40 = por %p38, %p39
      %p41 = scmp.ne.s32.totalorder %s30, %s31
      %p42 = scmp.eq.s32.totalorder %s22, 0
      %p43 = por %p41, %p42
      %p44 = scmp.ne.s32.totalorder %s30, %s31
      %p45 = scmp.eq.s32.totalorder %s23, 1
      %p46 = por %p44, %p45
      %p48 = scmp.ne.s32.totalorder %s31, %s47
      %p49 = scmp.eq.s32.totalorder %s23, 0
      %p50 = por %p48, %p49
      %s52 = sadd.s32 %s51, 1
      %p55 = scmp.eq.s32.totalorder %s17, 1
      %p56 = scmp.ne.s32.totalorder %s51, %s53
      %p57 = scmp.eq.s32.totalorder %s17, 0
      %p58 = por %p56, %p57
      %p59 = scmp.ne.s32.totalorder %s51, %s53
      %p60 = scmp.eq.s32.totalorder %s22, 1
      %p61 = por %p59, %p60
      %p62 = scmp.ne.s32.totalorder %s53, %s54
      %p63 = scmp.eq.s32.totalorder %s22, 0
      %p64 = por %p62, %p63
      %p65 = scmp.ne.s32.totalorder %s53, %s54
      %p66 = scmp.eq.s32.totalorder %s23, 1
      %p67 = por %p65, %p66
      %p69 = scmp.ne.s32.totalorder %s54, %s68
      %p70 = scmp.eq.s32.totalorder %s23, 0
      %p71 = por %p69, %p70
      %s73 = sadd.s32 %s72, 1
      %p76 = scmp.eq.s32.totalorder %s17, 1
      %p77 = scmp.ne.s32.totalorder %s72, %s74
      %p78 = scmp.eq.s32.totalorder %s17, 0
      %p79 = por %p77, %p78
      %p80 = scmp.ne.s32.totalorder %s72, %s74
      %p81 = scmp.eq.s32.totalorder %s22, 1
      %p82 = por %p80, %p81
      %p83 = scmp.ne.s32.totalorder %s74, %s75
      %p84 = scmp.eq.s32.totalorder %s22, 0
      %p85 = por %p83, %p84
      %p86 = scmp.ne.s32.totalorder %s74, %s75
      %p87 = scmp.eq.s32.totalorder %s23, 1
      %p88 = por %p86, %p87
      %p90 = scmp.ne.s32.totalorder %s75, %s89
      %p91 = scmp.eq.s32.totalorder %s23, 0
      %p92 = por %p90, %p91
      %s94 = sadd.s32 %s93, 1
      %p97 = scmp.eq.s32.totalorder %s17, 1
      %p98 = scmp.ne.s32.totalorder %s93, %s95
      %p99 = scmp.eq.s32.totalorder %s17, 0
      %p100 = por %p98, %p99
      %p101 = scmp.ne.s32.totalorder %s93, %s95
      %p102 = scmp.eq.s32.totalorder %s22, 1
      %p103 = por %p101, %p102
      %p104 = scmp.ne.s32.totalorder %s95, %s96
      %p105 = scmp.eq.s32.totalorder %s22, 0
      %p106 = por %p104, %p105
      %p107 = scmp.ne.s32.totalorder %s95, %s96
      %p108 = scmp.eq.s32.totalorder %s23, 1
      %p109 = por %p107, %p108
      %p111 = scmp.ne.s32.totalorder %s96, %s110
      %p112 = scmp.eq.s32.totalorder %s23, 0
      %p113 = por %p111, %p112
      %s115 = sadd.s32 %s114, 1
      %p118 = scmp.eq.s32.totalorder %s17, 1
      %p119 = scmp.ne.s32.totalorder %s114, %s116
      %p120 = scmp.eq.s32.totalorder %s17, 0
      %p121 = por %p119, %p120
      %p122 = scmp.ne.s32.totalorder %s114, %s116
      %p123 = scmp.eq.s32.totalorder %s22, 1
      %p124 = por %p122, %p123
      %p125 = scmp.ne.s32.totalorder %s116, %s117
      %p126 = scmp.eq.s32.totalorder %s22, 0
      %p127 = por %p125, %p126
      %p128 = scmp.ne.s32.totalorder %s116, %s117
      %p129 = scmp.eq.s32.totalorder %s23, 1
      %p130 = por %p128, %p129
      %p132 = scmp.ne.s32.totalorder %s117, %s131
      %p133 = scmp.eq.s32.totalorder %s23, 0
      %p134 = por %p132, %p133
      %s136 = sadd.s32 %s135, 1
      %p139 = scmp.eq.s32.totalorder %s17, 1
      %p140 = scmp.ne.s32.totalorder %s135, %s137
      %p141 = scmp.eq.s32.totalorder %s17, 0
      %p142 = por %p140, %p141
      %p143 = scmp.ne.s32.totalorder %s135, %s137
      %p144 = scmp.eq.s32.totalorder %s22, 1
      %p145 = por %p143, %p144
      %p146 = scmp.ne.s32.totalorder %s137, %s138
      %p147 = scmp.eq.s32.totalorder %s22, 0
      %p148 = por %p146, %p147
      %p149 = scmp.ne.s32.totalorder %s137, %s138
      %p150 = scmp.eq.s32.totalorder %s23, 1
      %p151 = por %p149, %p150
      %p153 = scmp.ne.s32.totalorder %s138, %s152
      %p154 = scmp.eq.s32.totalorder %s23, 0
      %p155 = por %p153, %p154
      %s156 = ssub.s32 %s17, %s24
      %p157 = scmp.eq.s32.totalorder %s156, 0
      %s159 = sadd.s32 %s158, 1
      %s160 = scalar_select %p157, %s158, %s159
      %p163 = pneg %p157
      %p164 = scmp.eq.s32.totalorder %s17, 1
      %p165 = por %p163, %p164
      %p166 = scmp.ne.s32.totalorder %s158, %s161
      %p167 = scmp.eq.s32.totalorder %s17, 0
      %p168 = por %p166, %p167
      %p169 = scmp.ne.s32.totalorder %s158, %s161
      %p170 = scmp.eq.s32.totalorder %s22, 1
      %p171 = por %p169, %p170
      %p172 = scmp.ne.s32.totalorder %s161, %s162
      %p173 = scmp.eq.s32.totalorder %s22, 0
      %p174 = por %p172, %p173
      %p175 = scmp.ne.s32.totalorder %s161, %s162
      %p176 = scmp.eq.s32.totalorder %s23, 1
      %p177 = por %p175, %p176
      %p179 = scmp.ne.s32.totalorder %s162, %s178
      %p180 = scmp.eq.s32.totalorder %s23, 0
      %p181 = por %p179, %p180
      %s182 = ssub.s32 %s17, %s24
      %p183 = scmp.eq.s32.totalorder %s182, 0
      %s185 = sadd.s32 %s184, 1
      %s186 = scalar_select %p183, %s184, %s185
      %p189 = pneg %p183
      %p190 = scmp.eq.s32.totalorder %s17, 1
      %p191 = por %p189, %p190
      %p192 = scmp.ne.s32.totalorder %s184, %s187
      %p193 = scmp.eq.s32.totalorder %s17, 0
      %p194 = por %p192, %p193
      %p195 = scmp.ne.s32.totalorder %s184, %s187
      %p196 = scmp.eq.s32.totalorder %s22, 1
      %p197 = por %p195, %p196
      %p198 = scmp.ne.s32.totalorder %s187, %s188
      %p199 = scmp.eq.s32.totalorder %s22, 0
      %p200 = por %p198, %p199
      %p201 = scmp.ne.s32.totalorder %s187, %s188
      %p202 = scmp.eq.s32.totalorder %s23, 1
      %p203 = por %p201, %p202
      %p205 = scmp.ne.s32.totalorder %s188, %s204
      %p206 = scmp.eq.s32.totalorder %s23, 0
      %p207 = por %p205, %p206
      %p208 = scmp.le.s32.totalorder 1, %s17
      %p209 = scmp.lt.s32.totalorder %s17, 3
      %p210 = pnand %p208, %p209
      %p211 = pneg %p210
      // Predicated region
      $region9: #{act_forward.1} parent=5 // pred_check
        _
      $region10: #{act_forward.1} parent=5 // pred_check_branch
        %213 = sbr.rel (%p210) target = $region12
      $region11: #{act_forward.1} parent=5 // pred_region
        %s214 = ssub.s32 %s17, 1
        // Predicated region
        $region13: #{act_forward.1} parent=11 // pred_check
          %p215 = pneg %p64
        $region14: #{act_forward.1} parent=11 // pred_check_branch
          %217 = sbr.rel (%p215) target = $region16
        $region15: #{act_forward.1} parent=11 // pred_region
          _
        $region16: #{act_forward.1} parent=11 // pred_fallthru
          _
        // Predicated region
        $region17: #{act_forward.1} parent=11 // pred_check
          %p218 = pneg %p85
        $region18: #{act_forward.1} parent=11 // pred_check_branch
          %220 = sbr.rel (%p218) target = $region20
        $region19: #{act_forward.1} parent=11 // pred_region
          _
        $region20: #{act_forward.1} parent=11 // pred_fallthru
          _
        // Predicated region
        $region21: #{act_forward.1} parent=11 // pred_check
          %p221 = pneg %p106
        $region22: #{act_forward.1} parent=11 // pred_check_branch
          %223 = sbr.rel (%p221) target = $region24
        $region23: #{act_forward.1} parent=11 // pred_region
          _
        $region24: #{act_forward.1} parent=11 // pred_fallthru
          _
        // Predicated region
        $region25: #{act_forward.1} parent=11 // pred_check
          %p224 = pneg %p127
        $region26: #{act_forward.1} parent=11 // pred_check_branch
          %226 = sbr.rel (%p224) target = $region28
        $region27: #{act_forward.1} parent=11 // pred_region
          _
        $region28: #{act_forward.1} parent=11 // pred_fallthru
          _
        // Predicated region
        $region29: #{act_forward.1} parent=11 // pred_check
          %p227 = pneg %p148
        $region30: #{act_forward.1} parent=11 // pred_check_branch
          %229 = sbr.rel (%p227) target = $region32
        $region31: #{act_forward.1} parent=11 // pred_region
          _
        $region32: #{act_forward.1} parent=11 // pred_fallthru
          _
      $region12: #{act_forward.1} parent=5 // pred_fallthru
        _
      %p230 = scmp.lt.s32.totalorder %s17, 2
      // Predicated region
      $region33: #{act_forward.1} parent=5 // pred_check
        %p231 = pneg %p230
      $region34: #{act_forward.1} parent=5 // pred_check_branch
        %233 = sbr.rel (%p231) target = $region36
      $region35: #{act_forward.1} parent=5 // pred_region
        // Predicated region
        $region37: #{act_forward.1} parent=35 // pred_check
          %p234 = pneg %p37
        $region38: #{act_forward.1} parent=35 // pred_check_branch
          %236 = sbr.rel (%p234) target = $region40
        $region39: #{act_forward.1} parent=35 // pred_region
          %p237 = scmp.lt.s32.totalorder %s17, 1
          %s238 = scalar_select %p237, %s17, 1
          %s239 = smul.addr %s238, 8
          %s240 = scalar_lea.vmem %s0, %s239
        $region40: #{act_forward.1} parent=35 // pred_fallthru
          _
      $region36: #{act_forward.1} parent=5 // pred_fallthru
        _
      %p241 = scmp.le.s32.totalorder 1, %s17
      %p242 = scmp.lt.s32.totalorder %s17, 3
      %p243 = pnand %p241, %p242
      %p244 = pneg %p243
      // Predicated region
      $region41: #{act_forward.1} parent=5 // pred_check
        _
      $region42: #{act_forward.1} parent=5 // pred_check_branch
        %246 = sbr.rel (%p243) target = $region44
      $region43: #{act_forward.1} parent=5 // pred_region
        %s247 = ssub.s32 %s17, 1
        %p248 = scmp.lt.s32.totalorder %s22, 1
        %s249 = scalar_select %p248, %s22, 1
        %s250 = smul.addr %s249, 8
        %s251 = scalar_lea.vmem %s0, %s250
        %p252 = pneg %p43
        %p253 = pneg %p40
        %p254 = pneg %p64
        %p255 = pneg %p61
        %p256 = pneg %p85
        %p257 = pneg %p82
        %p258 = pneg %p106
        %p259 = pneg %p103
        %p260 = pneg %p127
        %p261 = pneg %p124
        %p262 = pneg %p148
        %p263 = pneg %p145
        %p264 = pneg %p174
        %p265 = pneg %p171
        %s266 = sand.u32 %s161, 1
        %s267 = scalar_lea.sflag [#allocation3], %s266
        %s268 = sand.u32 %s161, 1
        %s269 = smul.addr %s268, 8
        %s270 = scalar_lea.vmem [#allocation2], %s269
        %p271 = pneg %p200
        %p272 = pneg %p197
        %p273 = scmp.lt.s32.totalorder %s22, 1
        %s274 = scalar_select %p273, %s22, 1
        %s275 = smul.addr %s274, 8
        %s276 = scalar_lea.vmem %s7, %s275
        %p277 = scmp.lt.s32.totalorder %s22, 1
        %s278 = scalar_select %p277, %s22, 1
        %s279 = smul.addr %s278, 8
        %s280 = scalar_lea.vmem %s0, %s279
        %p281 = scmp.lt.s32.totalorder %s22, 1
        %s282 = scalar_select %p281, %s22, 1
        %s283 = smul.addr %s282, 8
        %s284 = scalar_lea.vmem %s7, %s283
        %v286 = vld [vmem:[%s1] sm:$0xff]
        %v287 = vld [vmem:[%s2] sm:$0xf]
        %v288 = vld [vmem:[%s2 + $0x4] sm:$0xf]
        %v289 = vld [vmem:[%s2 + $0x8] sm:$0xf]
        %v290 = vld [vmem:[%s2 + $0xc] sm:$0xf]
        %v291 = vld [vmem:[%s4] sm:$0x1]
        %v292 = vld [vmem:[%s280] sm:$0xff]
        %v293 = vadd.f32 %v292, %v286
        %v294 = vpack.c.bf16 %v293, %v293
        %v295 = vld [vmem:[%s3] sm:$0x1]
        %v296 = vlaneseq
        %v297 = vshrl.u32 %v296, 7
        %v298 = vsub.s32 0, %v297
        %v299 = vrot.slane %v295, %v298
        %v304 = vunpack.c.l.b16 %v287
        %v305 = vunpack.c.l.b16 %v288
        %v306 = vunpack.c.l.b16 %v289
        %v307 = vunpack.c.l.b16 %v290
        %v308 = vpack.c.b16 %v305, %v304
        %v309 = vpack.c.b16 %v307, %v306
        %vm312 = vcmask 261120
        %v314 = vsel %vm312, %v294, 0
        %316 = vmatprep.subr.bf16.mxu0 0
        %317 = vmatpush1.bf16.msra.mxu0 %v308
        %318 = vmatprep.subr.bf16.mxu0 0
        %319 = vmatpush1.bf16.msra.mxu0 %v309
        %320 = vmatprep.subr.bf16.mxu0 0
        %321 = vmatpush1.bf16.msra.mxu0 0
        %322 = vmatprep.subr.bf16.mxu0 0
        %323 = vmatpush1.bf16.msra.mxu0 0
        %324 = vmatprep.subr.bf16.mxu0 0
        %325 = vmatpush1.bf16.msra.mxu0 0
        %326 = vmatprep.subr.bf16.mxu0 0
        %327 = vmatpush1.bf16.msra.mxu0 0
        %328 = vmatprep.subr.bf16.mxu0 0
        %329 = vmatpush1.bf16.msra.mxu0 0
        %330 = vmatprep.subr.bf16.mxu0 0
        %331 = vmatpush1.bf16.msra.mxu0 0
        %332 = vmatprep.subr.bf16.mxu0 0
        %333 = vmatpush1.bf16.msra.mxu0 0
        %334 = vmatprep.subr.bf16.mxu0 0
        %335 = vmatpush1.bf16.msra.mxu0 0
        %336 = vmatprep.subr.bf16.mxu0 0
        %337 = vmatpush1.bf16.msra.mxu0 0
        %338 = vmatprep.subr.bf16.mxu0 0
        %339 = vmatpush1.bf16.msra.mxu0 0
        %340 = vmatprep.subr.bf16.mxu0 0
        %341 = vmatpush1.bf16.msra.mxu0 0
        %342 = vmatprep.subr.bf16.mxu0 0
        %343 = vmatpush1.bf16.msra.mxu0 0
        %344 = vmatprep.subr.bf16.mxu0 0
        %345 = vmatpush1.bf16.msra.mxu0 0
        %346 = vmatprep.subr.bf16.mxu0 0
        %347 = vmatpush1.bf16.msra.mxu0 0
        %348 = vmatprep.mubr.bf16.mxu0 0
        %349 = vmatmul.mubr.bf16.gmra.mrb[0].mxu0 %v314
        %v350 = vpop.f32.mrb[0].mxu0
        %v351 = vadd.f32 %v299, %v350
        %v352 = vpop.f32.mrb[0].mxu0
        %v353 = vpop.f32.mrb[0].mxu0
        %v354 = vpop.f32.mrb[0].mxu0
        %355 = vdwg.mxu0
        %v356 = vmax.f32 %v351, 0.0
        %v358 = vlaneseq
        %v359 = vshrl.u32 %v358, 7
        %v360 = vsub.s32 0, %v359
        %v361 = vrot.slane %v291, %v360
        %v363 = vmul.f32 %v293, %v361
        %v364 = vsel %vm312, %v363, 0.0
        %365 = vadd.xlane.f32.xlu0 %v364
        %v366 = vpop.xlane.xlu0 %365
        %v367 = vld [vmem:[%s5] sm:$0x1]
        %v368 = vlaneseq
        %v369 = vshrl.u32 %v368, 7
        %v370 = vsub.s32 0, %v369
        %v371 = vrot.slane %v367, %v370
        %v372 = vadd.f32 %v366, %v371
        %v373 = vxor.u32 %v372, 2147483648
        %v374 = vmul.f32 %v373, 1.442695
        %v375 = vpow.pop %v374
        %v376 = vadd.f32 %v375, 1.0
        %v377 = vrcp.pop %v376
        %v378 = vmul.f32 1.0, %v377
        %vm379 = vcmp.lt.f32.partialorder 0.0, 1.0
        %v380 = vsel %vm379, 1, 0
        %v381 = vcvt.s32.f32 %v380
        %v382 = vmul.f32 %v378, %v381
        %v383 = vadd.f32 %v382, 0.0
        %vm384 = vcmp.gt.f32.partialorder %v383, 0.9
        %v385 = vsel %vm384, 1, 0
        %v386 = vcvt.s32.f32 %v385
        %v387 = vmul.f32 %v386, %v381
        %vm388 = vcmp.le.f32.partialorder %v383, 0.9
        %v389 = vsel %vm388, 1, 0
        %v390 = vcvt.s32.f32 %v389
        %v391 = vmul.f32 %v390, %v381
        %v392 = vmul.f32 %v378, %v391
        %v393 = vadd.f32 %v392, 0.0
        %v394 = vsub.f32 1.0, %v393
        %v395 = vmul.f32 %v387, %v394
        %v396 = vadd.f32 %v395, 0.0
        %v397 = vmul.f32 %v387, %v396
        %v398 = vadd.f32 %v393, %v397
        %v399 = vadd.f32 %v391, 0.0
        %v400 = vadd.f32 %v399, %v387
        %v401 = vadd.f32 %v392, %v397
        %403 = vset.pattern.permute.xlu0 0
        %404 = vperm.xlu0 %403, %v401
        %v405 = vpop.permute.xlu0 %404
        %v407 = vmul.f32 %v405, %v356
        %v408 = vadd.f32 %v407, 0.0
        %v409 = vadd.f32 %v356, %v286
        %v410 = vpack.c.bf16 %v409, %v409
        %v411 = vld [vmem:[%s3 + $0x1] sm:$0x1]
        %v412 = vlaneseq
        %v413 = vshrl.u32 %v412, 7
        %v414 = vsub.s32 0, %v413
        %v415 = vrot.slane %v411, %v414
        %v417 = vsel %vm312, %v410, 0
        %419 = vmatprep.subr.bf16.mxu0 0
        %420 = vmatpush1.bf16.msra.mxu0 %v308
        %421 = vmatprep.subr.bf16.mxu0 0
        %422 = vmatpush1.bf16.msra.mxu0 %v309
        %423 = vmatprep.subr.bf16.mxu0 0
        %424 = vmatpush1.bf16.msra.mxu0 0
        %425 = vmatprep.subr.bf16.mxu0 0
        %426 = vmatpush1.bf16.msra.mxu0 0
        %427 = vmatprep.subr.bf16.mxu0 0
        %428 = vmatpush1.bf16.msra.mxu0 0
        %429 = vmatprep.subr.bf16.mxu0 0
        %430 = vmatpush1.bf16.msra.mxu0 0
        %431 = vmatprep.subr.bf16.mxu0 0
        %432 = vmatpush1.bf16.msra.mxu0 0
        %433 = vmatprep.subr.bf16.mxu0 0
        %434 = vmatpush1.bf16.msra.mxu0 0
        %435 = vmatprep.subr.bf16.mxu0 0
        %436 = vmatpush1.bf16.msra.mxu0 0
        %437 = vmatprep.subr.bf16.mxu0 0
        %438 = vmatpush1.bf16.msra.mxu0 0
        %439 = vmatprep.subr.bf16.mxu0 0
        %440 = vmatpush1.bf16.msra.mxu0 0
        %441 = vmatprep.subr.bf16.mxu0 0
        %442 = vmatpush1.bf16.msra.mxu0 0
        %443 = vmatprep.subr.bf16.mxu0 0
        %444 = vmatpush1.bf16.msra.mxu0 0
        %445 = vmatprep.subr.bf16.mxu0 0
        %446 = vmatpush1.bf16.msra.mxu0 0
        %447 = vmatprep.subr.bf16.mxu0 0
        %448 = vmatpush1.bf16.msra.mxu0 0
        %449 = vmatprep.subr.bf16.mxu0 0
        %450 = vmatpush1.bf16.msra.mxu0 0
        %451 = vmatprep.mubr.bf16.mxu0 0
        %452 = vmatmul.mubr.bf16.gmra.mrb[0].mxu0 %v417
        %v453 = vpop.f32.mrb[0].mxu0
        %v454 = vadd.f32 %v415, %v453
        %v455 = vpop.f32.mrb[0].mxu0
        %v456 = vpop.f32.mrb[0].mxu0
        %v457 = vpop.f32.mrb[0].mxu0
        %458 = vdwg.mxu0
        %v459 = vmax.f32 %v454, 0.0
        %v460 = vmul.f32 %v409, %v361
        %v461 = vsel %vm312, %v460, 0.0
        %462 = vadd.xlane.f32.xlu0 %v461
        %v463 = vpop.xlane.xlu0 %462
        %v464 = vld [vmem:[%s5 + $0x1] sm:$0x1]
        %v465 = vlaneseq
        %v466 = vshrl.u32 %v465, 7
        %v467 = vsub.s32 0, %v466
        %v468 = vrot.slane %v464, %v467
        %v469 = vadd.f32 %v463, %v468
        %v470 = vxor.u32 %v469, 2147483648
        %v471 = vmul.f32 %v470, 1.442695
        %v472 = vpow.pop %v471
        %v473 = vadd.f32 %v472, 1.0
        %v474 = vrcp.pop %v473
        %v475 = vmul.f32 1.0, %v474
        %vm476 = vcmp.lt.f32.partialorder %v398, 1.0
        %v477 = vsel %vm476, 1, 0
        %v478 = vcvt.s32.f32 %v477
        %v479 = vmul.f32 %v475, %v478
        %v480 = vadd.f32 %v398, %v479
        %vm481 = vcmp.gt.f32.partialorder %v480, 0.9
        %v482 = vsel %vm481, 1, 0
        %v483 = vcvt.s32.f32 %v482
        %v484 = vmul.f32 %v483, %v478
        %vm485 = vcmp.le.f32.partialorder %v480, 0.9
        %v486 = vsel %vm485, 1, 0
        %v487 = vcvt.s32.f32 %v486
        %v488 = vmul.f32 %v487, %v478
        %v489 = vmul.f32 %v475, %v488
        %v490 = vadd.f32 %v398, %v489
        %v491 = vsub.f32 1.0, %v490
        %v492 = vmul.f32 %v484, %v491
        %v493 = vadd.f32 %v396, %v492
        %v494 = vmul.f32 %v484, %v493
        %v495 = vadd.f32 %v490, %v494
        %v496 = vadd.f32 %v400, %v488
        %v497 = vadd.f32 %v496, %v484
        %v498 = vadd.f32 %v489, %v494
        %v499 = vsub.f32 %v459, %v408
        %501 = vset.pattern.permute.xlu0 0
        %502 = vperm.xlu0 %501, %v498
        %v503 = vpop.permute.xlu0 %502
        %v505 = vmul.f32 %v503, %v499
        %v506 = vadd.f32 %v408, %v505
        %v507 = vadd.f32 %v459, %v286
        %v508 = vpack.c.bf16 %v507, %v507
        %v509 = vld [vmem:[%s3 + $0x2] sm:$0x1]
        %v510 = vlaneseq
        %v511 = vshrl.u32 %v510, 7
        %v512 = vsub.s32 0, %v511
        %v513 = vrot.slane %v509, %v512
        %v515 = vsel %vm312, %v508, 0
        %517 = vmatprep.subr.bf16.mxu0 0
        %518 = vmatpush1.bf16.msra.mxu0 %v308
        %519 = vmatprep.subr.bf16.mxu0 0
        %520 = vmatpush1.bf16.msra.mxu0 %v309
        %521 = vmatprep.subr.bf16.mxu0 0
        %522 = vmatpush1.bf16.msra.mxu0 0
        %523 = vmatprep.subr.bf16.mxu0 0
        %524 = vmatpush1.bf16.msra.mxu0 0
        %525 = vmatprep.subr.bf16.mxu0 0
        %526 = vmatpush1.bf16.msra.mxu0 0
        %527 = vmatprep.subr.bf16.mxu0 0
        %528 = vmatpush1.bf16.msra.mxu0 0
        %529 = vmatprep.subr.bf16.mxu0 0
        %530 = vmatpush1.bf16.msra.mxu0 0
        %531 = vmatprep.subr.bf16.mxu0 0
        %532 = vmatpush1.bf16.msra.mxu0 0
        %533 = vmatprep.subr.bf16.mxu0 0
        %534 = vmatpush1.bf16.msra.mxu0 0
        %535 = vmatprep.subr.bf16.mxu0 0
        %536 = vmatpush1.bf16.msra.mxu0 0
        %537 = vmatprep.subr.bf16.mxu0 0
        %538 = vmatpush1.bf16.msra.mxu0 0
        %539 = vmatprep.subr.bf16.mxu0 0
        %540 = vmatpush1.bf16.msra.mxu0 0
        %541 = vmatprep.subr.bf16.mxu0 0
        %542 = vmatpush1.bf16.msra.mxu0 0
        %543 = vmatprep.subr.bf16.mxu0 0
        %544 = vmatpush1.bf16.msra.mxu0 0
        %545 = vmatprep.subr.bf16.mxu0 0
        %546 = vmatpush1.bf16.msra.mxu0 0
        %547 = vmatprep.subr.bf16.mxu0 0
        %548 = vmatpush1.bf16.msra.mxu0 0
        %549 = vmatprep.mubr.bf16.mxu0 0
        %550 = vmatmul.mubr.bf16.gmra.mrb[0].mxu0 %v515
        %v551 = vpop.f32.mrb[0].mxu0
        %v552 = vadd.f32 %v513, %v551
        %v553 = vpop.f32.mrb[0].mxu0
        %v554 = vpop.f32.mrb[0].mxu0
        %v555 = vpop.f32.mrb[0].mxu0
        %556 = vdwg.mxu0
        %v557 = vmax.f32 %v552, 0.0
        %v558 = vmul.f32 %v507, %v361
        %v559 = vsel %vm312, %v558, 0.0
        %560 = vadd.xlane.f32.xlu0 %v559
        %v561 = vpop.xlane.xlu0 %560
        %v562 = vld [vmem:[%s5 + $0x2] sm:$0x1]
        %v563 = vlaneseq
        %v564 = vshrl.u32 %v563, 7
        %v565 = vsub.s32 0, %v564
        %v566 = vrot.slane %v562, %v565
        %v567 = vadd.f32 %v561, %v566
        %v568 = vxor.u32 %v567, 2147483648
        %v569 = vmul.f32 %v568, 1.442695
        %v570 = vpow.pop %v569
        %v571 = vadd.f32 %v570, 1.0
        %v572 = vrcp.pop %v571
        %v573 = vmul.f32 1.0, %v572
        %vm574 = vcmp.lt.f32.partialorder %v495, 1.0
        %v575 = vsel %vm574, 1, 0
        %v576 = vcvt.s32.f32 %v575
        %v577 = vmul.f32 %v573, %v576
        %v578 = vadd.f32 %v495, %v577
        %vm579 = vcmp.gt.f32.partialorder %v578, 0.9
        %v580 = vsel %vm579, 1, 0
        %v581 = vcvt.s32.f32 %v580
        %v582 = vmul.f32 %v581, %v576
        %vm583 = vcmp.le.f32.partialorder %v578, 0.9
        %v584 = vsel %vm583, 1, 0
        %v585 = vcvt.s32.f32 %v584
        %v586 = vmul.f32 %v585, %v576
        %v587 = vmul.f32 %v573, %v586
        %v588 = vadd.f32 %v495, %v587
        %v589 = vsub.f32 1.0, %v588
        %v590 = vmul.f32 %v582, %v589
        %v591 = vadd.f32 %v493, %v590
        %v592 = vmul.f32 %v582, %v591
        %v593 = vadd.f32 %v588, %v592
        %v594 = vadd.f32 %v497, %v586
        %v595 = vadd.f32 %v594, %v582
        %v596 = vadd.f32 %v587, %v592
        %v597 = vsub.f32 %v557, %v506
        %599 = vset.pattern.permute.xlu0 0
        %600 = vperm.xlu0 %599, %v596
        %v601 = vpop.permute.xlu0 %600
        %v603 = vmul.f32 %v601, %v597
        %v604 = vadd.f32 %v506, %v603
        %v605 = vadd.f32 %v557, %v286
        %v606 = vpack.c.bf16 %v605, %v605
        %v607 = vld [vmem:[%s3 + $0x3] sm:$0x1]
        %v608 = vlaneseq
        %v609 = vshrl.u32 %v608, 7
        %v610 = vsub.s32 0, %v609
        %v611 = vrot.slane %v607, %v610
        %v613 = vsel %vm312, %v606, 0
        %615 = vmatprep.subr.bf16.mxu0 0
        %616 = vmatpush1.bf16.msra.mxu0 %v308
        %617 = vmatprep.subr.bf16.mxu0 0
        %618 = vmatpush1.bf16.msra.mxu0 %v309
        %619 = vmatprep.subr.bf16.mxu0 0
        %620 = vmatpush1.bf16.msra.mxu0 0
        %621 = vmatprep.subr.bf16.mxu0 0
        %622 = vmatpush1.bf16.msra.mxu0 0
        %623 = vmatprep.subr.bf16.mxu0 0
        %624 = vmatpush1.bf16.msra.mxu0 0
        %625 = vmatprep.subr.bf16.mxu0 0
        %626 = vmatpush1.bf16.msra.mxu0 0
        %627 = vmatprep.subr.bf16.mxu0 0
        %628 = vmatpush1.bf16.msra.mxu0 0
        %629 = vmatprep.subr.bf16.mxu0 0
        %630 = vmatpush1.bf16.msra.mxu0 0
        %631 = vmatprep.subr.bf16.mxu0 0
        %632 = vmatpush1.bf16.msra.mxu0 0
        %633 = vmatprep.subr.bf16.mxu0 0
        %634 = vmatpush1.bf16.msra.mxu0 0
        %635 = vmatprep.subr.bf16.mxu0 0
        %636 = vmatpush1.bf16.msra.mxu0 0
        %637 = vmatprep.subr.bf16.mxu0 0
        %638 = vmatpush1.bf16.msra.mxu0 0
        %639 = vmatprep.subr.bf16.mxu0 0
        %640 = vmatpush1.bf16.msra.mxu0 0
        %641 = vmatprep.subr.bf16.mxu0 0
        %642 = vmatpush1.bf16.msra.mxu0 0
        %643 = vmatprep.subr.bf16.mxu0 0
        %644 = vmatpush1.bf16.msra.mxu0 0
        %645 = vmatprep.subr.bf16.mxu0 0
        %646 = vmatpush1.bf16.msra.mxu0 0
        %647 = vmatprep.mubr.bf16.mxu0 0
        %648 = vmatmul.mubr.bf16.gmra.mrb[0].mxu0 %v613
        %v649 = vpop.f32.mrb[0].mxu0
        %v650 = vadd.f32 %v611, %v649
        %v651 = vpop.f32.mrb[0].mxu0
        %v652 = vpop.f32.mrb[0].mxu0
        %v653 = vpop.f32.mrb[0].mxu0
        %654 = vdwg.mxu0
        %v655 = vmax.f32 %v650, 0.0
        %v656 = vmul.f32 %v605, %v361
        %v657 = vsel %vm312, %v656, 0.0
        %658 = vadd.xlane.f32.xlu0 %v657
        %v659 = vpop.xlane.xlu0 %658
        %v660 = vld [vmem:[%s5 + $0x3] sm:$0x1]
        %v661 = vlaneseq
        %v662 = vshrl.u32 %v661, 7
        %v663 = vsub.s32 0, %v662
        %v664 = vrot.slane %v660, %v663
        %v665 = vadd.f32 %v659, %v664
        %v666 = vxor.u32 %v665, 2147483648
        %v667 = vmul.f32 %v666, 1.442695
        %v668 = vpow.pop %v667
        %v669 = vadd.f32 %v668, 1.0
        %v670 = vrcp.pop %v669
        %v671 = vmul.f32 1.0, %v670
        %vm672 = vcmp.lt.f32.partialorder %v593, 1.0
        %v673 = vsel %vm672, 1, 0
        %v674 = vcvt.s32.f32 %v673
        %v675 = vmul.f32 %v671, %v674
        %v676 = vadd.f32 %v593, %v675
        %vm677 = vcmp.gt.f32.partialorder %v676, 0.9
        %v678 = vsel %vm677, 1, 0
        %v679 = vcvt.s32.f32 %v678
        %v680 = vmul.f32 %v679, %v674
        %vm681 = vcmp.le.f32.partialorder %v676, 0.9
        %v682 = vsel %vm681, 1, 0
        %v683 = vcvt.s32.f32 %v682
        %v684 = vmul.f32 %v683, %v674
        %v685 = vmul.f32 %v671, %v684
        %v686 = vadd.f32 %v593, %v685
        %v687 = vsub.f32 1.0, %v686
        %v688 = vmul.f32 %v680, %v687
        %v689 = vadd.f32 %v591, %v688
        %v690 = vmul.f32 %v680, %v689
        %v691 = vadd.f32 %v686, %v690
        %v692 = vadd.f32 %v595, %v684
        %v693 = vadd.f32 %v692, %v680
        %v694 = vadd.f32 %v685, %v690
        %v695 = vsub.f32 %v655, %v604
        %697 = vset.pattern.permute.xlu0 0
        %698 = vperm.xlu0 %697, %v694
        %v699 = vpop.permute.xlu0 %698
        %v701 = vmul.f32 %v699, %v695
        %v702 = vadd.f32 %v604, %v701
        %v703 = vadd.f32 %v655, %v286
        %v704 = vpack.c.bf16 %v703, %v703
        %v705 = vld [vmem:[%s3 + $0x4] sm:$0x1]
        %v706 = vlaneseq
        %v707 = vshrl.u32 %v706, 7
        %v708 = vsub.s32 0, %v707
        %v709 = vrot.slane %v705, %v708
        %v711 = vsel %vm312, %v704, 0
        %713 = vmatprep.subr.bf16.mxu0 0
        %714 = vmatpush1.bf16.msra.mxu0 %v308
        %715 = vmatprep.subr.bf16.mxu0 0
        %716 = vmatpush1.bf16.msra.mxu0 %v309
        %717 = vmatprep.subr.bf16.mxu0 0
        %718 = vmatpush1.bf16.msra.mxu0 0
        %719 = vmatprep.subr.bf16.mxu0 0
        %720 = vmatpush1.bf16.msra.mxu0 0
        %721 = vmatprep.subr.bf16.mxu0 0
        %722 = vmatpush1.bf16.msra.mxu0 0
        %723 = vmatprep.subr.bf16.mxu0 0
        %724 = vmatpush1.bf16.msra.mxu0 0
        %725 = vmatprep.subr.bf16.mxu0 0
        %726 = vmatpush1.bf16.msra.mxu0 0
        %727 = vmatprep.subr.bf16.mxu0 0
        %728 = vmatpush1.bf16.msra.mxu0 0
        %729 = vmatprep.subr.bf16.mxu0 0
        %730 = vmatpush1.bf16.msra.mxu0 0
        %731 = vmatprep.subr.bf16.mxu0 0
        %732 = vmatpush1.bf16.msra.mxu0 0
        %733 = vmatprep.subr.bf16.mxu0 0
        %734 = vmatpush1.bf16.msra.mxu0 0
        %735 = vmatprep.subr.bf16.mxu0 0
        %736 = vmatpush1.bf16.msra.mxu0 0
        %737 = vmatprep.subr.bf16.mxu0 0
        %738 = vmatpush1.bf16.msra.mxu0 0
        %739 = vmatprep.subr.bf16.mxu0 0
        %740 = vmatpush1.bf16.msra.mxu0 0
        %741 = vmatprep.subr.bf16.mxu0 0
        %742 = vmatpush1.bf16.msra.mxu0 0
        %743 = vmatprep.subr.bf16.mxu0 0
        %744 = vmatpush1.bf16.msra.mxu0 0
        %745 = vmatprep.mubr.bf16.mxu0 0
        %746 = vmatmul.mubr.bf16.gmra.mrb[0].mxu0 %v711
        %v747 = vpop.f32.mrb[0].mxu0
        %v748 = vadd.f32 %v709, %v747
        %v749 = vpop.f32.mrb[0].mxu0
        %v750 = vpop.f32.mrb[0].mxu0
        %v751 = vpop.f32.mrb[0].mxu0
        %752 = vdwg.mxu0
        %v753 = vmax.f32 %v748, 0.0
        %v754 = vmul.f32 %v703, %v361
        %v755 = vsel %vm312, %v754, 0.0
        %756 = vadd.xlane.f32.xlu0 %v755
        %v757 = vpop.xlane.xlu0 %756
        %v758 = vld [vmem:[%s5 + $0x4] sm:$0x1]
        %v759 = vlaneseq
        %v760 = vshrl.u32 %v759, 7
        %v761 = vsub.s32 0, %v760
        %v762 = vrot.slane %v758, %v761
        %v763 = vadd.f32 %v757, %v762
        %v764 = vxor.u32 %v763, 2147483648
        %v765 = vmul.f32 %v764, 1.442695
        %v766 = vpow.pop %v765
        %v767 = vadd.f32 %v766, 1.0
        %v768 = vrcp.pop %v767
        %v769 = vmul.f32 1.0, %v768
        %vm770 = vcmp.lt.f32.partialorder %v691, 1.0
        %v771 = vsel %vm770, 1, 0
        %v772 = vcvt.s32.f32 %v771
        %v773 = vmul.f32 %v769, %v772
        %v774 = vadd.f32 %v691, %v773
        %vm775 = vcmp.gt.f32.partialorder %v774, 0.9
        %v776 = vsel %vm775, 1, 0
        %v777 = vcvt.s32.f32 %v776
        %v778 = vmul.f32 %v777, %v772
        %vm779 = vcmp.le.f32.partialorder %v774, 0.9
        %v780 = vsel %vm779, 1, 0
        %v781 = vcvt.s32.f32 %v780
        %v782 = vmul.f32 %v781, %v772
        %v783 = vmul.f32 %v769, %v782
        %v784 = vadd.f32 %v691, %v783
        %v785 = vsub.f32 1.0, %v784
        %v786 = vmul.f32 %v778, %v785
        %v787 = vadd.f32 %v689, %v786
        %v788 = vmul.f32 %v778, %v787
        %v789 = vadd.f32 %v784, %v788
        %v790 = vadd.f32 %v693, %v782
        %v791 = vadd.f32 %v790, %v778
        %v792 = vadd.f32 %v783, %v788
        %v793 = vsub.f32 %v753, %v702
        %795 = vset.pattern.permute.xlu0 0
        %796 = vperm.xlu0 %795, %v792
        %v797 = vpop.permute.xlu0 %796
        %v799 = vmul.f32 %v797, %v793
        %v800 = vadd.f32 %v702, %v799
        %v801 = vadd.f32 %v753, %v286
        %v802 = vpack.c.bf16 %v801, %v801
        %v803 = vld [vmem:[%s3 + $0x5] sm:$0x1]
        %v804 = vlaneseq
        %v805 = vshrl.u32 %v804, 7
        %v806 = vsub.s32 0, %v805
        %v807 = vrot.slane %v803, %v806
        %v809 = vsel %vm312, %v802, 0
        %811 = vmatprep.subr.bf16.mxu0 0
        %812 = vmatpush1.bf16.msra.mxu0 %v308
        %813 = vmatprep.subr.bf16.mxu0 0
        %814 = vmatpush1.bf16.msra.mxu0 %v309
        %815 = vmatprep.subr.bf16.mxu0 0
        %816 = vmatpush1.bf16.msra.mxu0 0
        %817 = vmatprep.subr.bf16.mxu0 0
        %818 = vmatpush1.bf16.msra.mxu0 0
        %819 = vmatprep.subr.bf16.mxu0 0
        %820 = vmatpush1.bf16.msra.mxu0 0
        %821 = vmatprep.subr.bf16.mxu0 0
        %822 = vmatpush1.bf16.msra.mxu0 0
        %823 = vmatprep.subr.bf16.mxu0 0
        %824 = vmatpush1.bf16.msra.mxu0 0
        %825 = vmatprep.subr.bf16.mxu0 0
        %826 = vmatpush1.bf16.msra.mxu0 0
        %827 = vmatprep.subr.bf16.mxu0 0
        %828 = vmatpush1.bf16.msra.mxu0 0
        %829 = vmatprep.subr.bf16.mxu0 0
        %830 = vmatpush1.bf16.msra.mxu0 0
        %831 = vmatprep.subr.bf16.mxu0 0
        %832 = vmatpush1.bf16.msra.mxu0 0
        %833 = vmatprep.subr.bf16.mxu0 0
        %834 = vmatpush1.bf16.msra.mxu0 0
        %835 = vmatprep.subr.bf16.mxu0 0
        %836 = vmatpush1.bf16.msra.mxu0 0
        %837 = vmatprep.subr.bf16.mxu0 0
        %838 = vmatpush1.bf16.msra.mxu0 0
        %839 = vmatprep.subr.bf16.mxu0 0
        %840 = vmatpush1.bf16.msra.mxu0 0
        %841 = vmatprep.subr.bf16.mxu0 0
        %842 = vmatpush1.bf16.msra.mxu0 0
        %843 = vmatprep.mubr.bf16.mxu0 0
        %844 = vmatmul.mubr.bf16.gmra.mrb[0].mxu0 %v809
        %v845 = vpop.f32.mrb[0].mxu0
        %v846 = vadd.f32 %v807, %v845
        %v847 = vpop.f32.mrb[0].mxu0
        %v848 = vpop.f32.mrb[0].mxu0
        %v849 = vpop.f32.mrb[0].mxu0
        %850 = vdwg.mxu0
        %v851 = vmax.f32 %v846, 0.0
        %v852 = vmul.f32 %v801, %v361
        %v853 = vsel %vm312, %v852, 0.0
        %854 = vadd.xlane.f32.xlu0 %v853
        %v855 = vpop.xlane.xlu0 %854
        %v856 = vld [vmem:[%s5 + $0x5] sm:$0x1]
        %v857 = vlaneseq
        %v858 = vshrl.u32 %v857, 7
        %v859 = vsub.s32 0, %v858
        %v860 = vrot.slane %v856, %v859
        %v861 = vadd.f32 %v855, %v860
        %v862 = vxor.u32 %v861, 2147483648
        %v863 = vmul.f32 %v862, 1.442695
        %v864 = vpow.pop %v863
        %v865 = vadd.f32 %v864, 1.0
        %v866 = vrcp.pop %v865
        %v867 = vmul.f32 1.0, %v866
        %vm868 = vcmp.lt.f32.partialorder %v789, 1.0
        %v869 = vsel %vm868, 1, 0
        %v870 = vcvt.s32.f32 %v869
        %v871 = vmul.f32 %v867, %v870
        %v872 = vadd.f32 %v789, %v871
        %vm873 = vcmp.gt.f32.partialorder %v872, 0.9
        %v874 = vsel %vm873, 1, 0
        %v875 = vcvt.s32.f32 %v874
        %v876 = vmul.f32 %v875, %v870
        %vm877 = vcmp.le.f32.partialorder %v872, 0.9
        %v878 = vsel %vm877, 1, 0
        %v879 = vcvt.s32.f32 %v878
        %v880 = vmul.f32 %v879, %v870
        %v881 = vmul.f32 %v867, %v880
        %v882 = vadd.f32 %v789, %v881
        %v883 = vsub.f32 1.0, %v882
        %v884 = vmul.f32 %v876, %v883
        %v885 = vadd.f32 %v787, %v884
        %v886 = vadd.f32 %v791, %v880
        %v887 = vadd.f32 %v886, %v876
        %v888 = vmul.f32 %v876, %v885
        %v889 = vadd.f32 %v881, %v888
        %v890 = vsub.f32 %v851, %v800
        %892 = vset.pattern.permute.xlu0 0
        %893 = vperm.xlu0 %892, %v889
        %v894 = vpop.permute.xlu0 %893
        %v896 = vmul.f32 %v894, %v890
        %v897 = vadd.f32 %v800, %v896
        %898 = vst.msk [vmem:[%s270] sm:$0xff] %vm312, %v897
        %900 = vrot.lane.b32.xlu0 %v887, 1
        %v901 = vpop.permute.xlu0 %900
        %vm903 = vcmask 7168
        %v904 = vsel %vm903, %v885, %v901
        %vm905 = vcmask 15360
        %906 = vst.msk [vmem:[%s284] sm:$0xff] %vm905, %v904
        %s907 = sand.u32 %s161, 1
        %s908 = scalar_lea.sflag [#allocation3], %s907
        %s909 = sand.u32 %s161, 1
        %s910 = smul.addr %s909, 8
        %s911 = scalar_lea.vmem [#allocation2], %s910
        %p912 = scmp.lt.s32.totalorder %s22, 1
        %s913 = scalar_select %p912, %s22, 1
        %s914 = smul.addr %s913, 8
        %s915 = scalar_lea.vmem %s7, %s914
        // Predicated region
        $region45: #{act_forward.1} parent=43 // pred_check
          %p916 = pneg %p171
        $region46: #{act_forward.1} parent=43 // pred_check_branch
          %918 = sbr.rel (%p916) target = $region48
        $region47: #{act_forward.1} parent=43 // pred_region
          %s920 = ssub.s32 128, 128
          %921 = vsyncadd %s908, %s920
          %s922 = smul.addr %s22, 128
          %s923 = scalar_lea.hbm %s6, %s922
          %s925 = sshll.u32 %s911, 4
          %s926 = int_to_ptr.vmem [resolvable:$true] %s925
          %928 = dma.vmem_to_hbm [thread:$0]  %s926, 128, %s923, %s908
        $region48: #{act_forward.1} parent=43 // pred_fallthru
          _
        // Predicated region
        $region49: #{act_forward.1} parent=43 // pred_check
          %p929 = pneg %p197
        $region50: #{act_forward.1} parent=43 // pred_check_branch
          %931 = sbr.rel (%p929) target = $region52
        $region51: #{act_forward.1} parent=43 // pred_region
          _
        $region52: #{act_forward.1} parent=43 // pred_fallthru
          _
      $region44: #{act_forward.1} parent=5 // pred_fallthru
        _
      %p932 = scmp.le.s32.totalorder 2, %s17
      // Predicated region
      $region53: #{act_forward.1} parent=5 // pred_check
        %p933 = pneg %p932
      $region54: #{act_forward.1} parent=5 // pred_check_branch
        %935 = sbr.rel (%p933) target = $region56
      $region55: #{act_forward.1} parent=5 // pred_region
        %s936 = ssub.s32 %s17, 2
        // Predicated region
        $region57: #{act_forward.1} parent=55 // pred_check
          %p937 = pneg %p177
        $region58: #{act_forward.1} parent=55 // pred_check_branch
          %939 = sbr.rel (%p937) target = $region60
        $region59: #{act_forward.1} parent=55 // pred_region
          %s940 = sand.u32 %s162, 1
          %s941 = scalar_lea.sflag [#allocation3], %s940
          %s942 = sand.u32 %s162, 1
          %s943 = smul.addr %s942, 8
          %s944 = scalar_lea.vmem [#allocation2], %s943
          %945 = dma.done %s941, 128
        $region60: #{act_forward.1} parent=55 // pred_fallthru
          _
        // Predicated region
        $region61: #{act_forward.1} parent=55 // pred_check
          %p946 = pneg %p203
        $region62: #{act_forward.1} parent=55 // pred_check_branch
          %948 = sbr.rel (%p946) target = $region64
        $region63: #{act_forward.1} parent=55 // pred_region
          %p949 = scmp.lt.s32.totalorder %s23, 1
          %s950 = scalar_select %p949, %s23, 1
          %s951 = smul.addr %s950, 8
          %s952 = scalar_lea.vmem %s7, %s951
        $region64: #{act_forward.1} parent=55 // pred_fallthru
          _
      $region56: #{act_forward.1} parent=5 // pred_fallthru
        _
    $region6: #{act_forward.1} parent=1 // loop_footer
      %s21 = sadd.s32 1, %s17
    $region7: #{act_forward.1} parent=1 // loop_footer_branch
      %16 = sbr.rel target = $region3
    $region8: #{act_forward.1} parent=1 // loop_exit
      _
    %953 = vsyncpa [#allocation3], 1
    %s954 = scalar_lea.sflag [#allocation3], 1
    %955 = vsyncpa %s954, 1

</llo_original>
